<compile_context>
chip_gen: v7x
topology: tpu7x:2x2x1
jax: 0.10.0
libtpu: 0.0.40
codegen_flags: <defaults>
</compile_context>

<pallas_src>
import functools
import math

import jax
import jax.numpy as jnp
from jax import lax
from jax.experimental import pallas as pl
from jax.experimental.pallas import tpu as pltpu


# ----------------------------- in-kernel helpers -----------------------------

def _layernorm_rows(y, gamma_row, beta_row, eps=1e-5):
    # PyTorch nn.LayerNorm: biased variance, eps inside the sqrt. Row-wise (last axis).
    mu = jnp.mean(y, axis=-1, keepdims=True)
    var = jnp.mean((y - mu) ** 2, axis=-1, keepdims=True)
    return (y - mu) * lax.rsqrt(var + eps) * gamma_row + beta_row


# ----------------------------- fused encoder kernel --------------------------

def encoder_kernel(x_ref, wqkv_ref, bqkv_ref, wo_ref, w1_ref, w2_ref,
                   rv_ref, fln_ref, out_ref, x_res, *, num_heads):
    l = pl.program_id(1)
    num_layers = pl.num_programs(1)

    bb, S, D = x_ref.shape
    R = bb * S
    H = num_heads
    Dh = D // H
    F = w1_ref.shape[2]
    cdt = wqkv_ref.dtype                       # matmul operand dtype (f32 / bf16)

    # Load the input row block once; it stays resident in VMEM across all layers.
    @pl.when(l == 0)
    def _init():
        x_res[...] = x_ref[...].reshape(R, D).astype(jnp.float32)

    x = x_res[...]                             # (R, D) f32 residual stream
    xc = x.astype(cdt)

    rv = rv_ref[0].astype(jnp.float32)         # (8, W) packed small vectors
    bo_row = rv[0:1, :D]
    b1_row = rv[1:2, :F]
    b2_row = rv[2:3, :D]
    g1, be1 = rv[3:4, :D], rv[4:5, :D]
    g2, be2 = rv[5:6, :D], rv[6:7, :D]

    # ---- fused QKV projection, transposed & head-major: (3D, R) --------------
    # (1/sqrt(Dh) already folded into the Q rows of wqkv / bqkv at pack time.)
    qkv_t = lax.dot_general(wqkv_ref[0], xc, (((1,), (1,)), ((), ())),
                            preferred_element_type=jnp.float32)
    qkv_t = qkv_t + bqkv_ref[0].astype(jnp.float32)             # bias column (3D, 1)

    # Head split is a pure sublane reshape in this layout.
    q_t = qkv_t[0 * D:1 * D].reshape(H, Dh, R).astype(cdt)      # (H, Dh, R)
    k_t = qkv_t[1 * D:2 * D].reshape(H, Dh, R).astype(cdt)
    v_t = qkv_t[2 * D:3 * D].reshape(H, Dh, R).astype(cdt)

    # ---- multi-head self-attention: all heads in one batched dot_general -----
    # Contract on the Dh (sublane) axis of both operands -> no explicit transpose.
    # TODO(synk): attention mask not implemented (mask=None path only).
    outs = []
    for b in range(bb):                    # static & small; heads are batched
        lo, hi = b * S, (b + 1) * S
        q_b = q_t[:, :, lo:hi]             # (H, Dh, S)
        k_b = k_t[:, :, lo:hi]             # (H, Dh, S)
        v_b = v_t[:, :, lo:hi]             # (H, Dh, S)
        s = lax.dot_general(q_b, k_b, (((1,), (1,)), ((0,), (0,))),
                            preferred_element_type=jnp.float32)     # (H, Sq, Sk)
        s = s - jnp.max(s, axis=-1, keepdims=True)
        p = jnp.exp(s)
        p = p * pl.reciprocal(jnp.sum(p, axis=-1, keepdims=True), approx=True)
        o_b = lax.dot_general(v_b, p.astype(cdt), (((2,), (2,)), ((0,), (0,))),
                              preferred_element_type=jnp.float32)   # (H, Dh, Sq)
        outs.append(o_b)
    attn_t = outs[0] if bb == 1 else jnp.concatenate(outs, axis=2)  # (H, Dh, R)
    attn_t = attn_t.reshape(D, R)

    # ---- attention output projection (Wo kept in native (out, in) layout) ----
    # attn[r, o] = sum_d attn_t[d, r] * wo[o, d]  -> row-major result directly.
    attn = lax.dot_general(attn_t.astype(cdt), wo_ref[0],
                           (((0,), (1,)), ((), ())),
                           preferred_element_type=jnp.float32) + bo_row   # (R, D)

    x1 = _layernorm_rows(x + attn, g1, be1)

    # ---- feed-forward ---------------------------------------------------------
    h = jnp.dot(x1.astype(cdt), w1_ref[0],
                preferred_element_type=jnp.float32) + b1_row         # (R, F)
    h = jnp.maximum(h, 0.0)
    ff = jnp.dot(h.astype(cdt), w2_ref[0],
                 preferred_element_type=jnp.float32) + b2_row        # (R, D)

    x2 = _layernorm_rows(x1 + ff, g2, be2)
    x_res[...] = x2

    # ---- final encoder LayerNorm fused as epilogue of the last layer ---------
    @pl.when(l == num_layers - 1)
    def _final():
        fln = fln_ref[...].astype(jnp.float32)                       # (2, D)
        y = _layernorm_rows(x2, fln[0:1], fln[1:2])
        out_ref[...] = y.reshape(bb, S, D).astype(out_ref.dtype)


# ----------------------------- wrapper ----------------------------------------

def transformer_encoder(x, packed, num_heads, *, block_b=1):
    """Run the fused encoder. block_b = batch elements per grid step
    (choose so block_b*S >= 128 and >= 2 batch blocks on v7x)."""
    B, S, D = x.shape
    assert B % block_b == 0
    L = packed["wqkv"].shape[0]
    F = packed["w1_t"].shape[2]
    W = packed["rowvecs"].shape[2]
    R = block_b * S

    kernel = functools.partial(encoder_kernel, num_heads=num_heads)
    return pl.pallas_call(
        kernel,
        out_shape=jax.ShapeDtypeStruct((B, S, D), x.dtype),
        grid=(B // block_b, L),
        in_specs=[
            pl.BlockSpec((block_b, S, D), lambda i, l: (i, 0, 0)),   # activations
            pl.BlockSpec((1, 3 * D, D), lambda i, l: (l, 0, 0)),     # fused QKV (out,in)
            pl.BlockSpec((1, 3 * D, 1), lambda i, l: (l, 0, 0)),     # QKV bias column
            pl.BlockSpec((1, D, D), lambda i, l: (l, 0, 0)),         # Wo (out,in)
            pl.BlockSpec((1, D, F), lambda i, l: (l, 0, 0)),         # W1^T (in,out)
            pl.BlockSpec((1, F, D), lambda i, l: (l, 0, 0)),         # W2^T (in,out)
            pl.BlockSpec((1, 8, W), lambda i, l: (l, 0, 0)),         # packed vectors
            pl.BlockSpec((2, D), lambda i, l: (0, 0)),               # final LN gamma/beta
        ],
        out_specs=pl.BlockSpec((block_b, S, D), lambda i, l: (i, 0, 0)),
        scratch_shapes=[pltpu.VMEM((R, D), jnp.float32)],            # resident activations
        compiler_params=pltpu.CompilerParams(
            dimension_semantics=("parallel", "arbitrary"),
            vmem_limit_bytes=64 * 1024 * 1024,
        ),
    )(x, packed["wqkv"], packed["bqkv_col"], packed["wo"],
      packed["w1_t"], packed["w2_t"], packed["rowvecs"], packed["final_ln"])


# ----------------------------- parameter packing -------------------------------

def pack_params(layer_params, final_gamma, final_beta, num_heads,
                compute_dtype=jnp.float32):
    """Stack PyTorch-layout per-layer params ((out,in) weights, (out,) biases)
    with a leading layer axis, in the layouts the fused kernel expects."""
    p0 = layer_params[0]
    D = p0["wq"].shape[0]
    F = p0["w1"].shape[0]
    scale = 1.0 / math.sqrt(D // num_heads)
    W = max(D, F)

    def pad(v):
        return jnp.pad(v, (0, W - v.shape[0]))

    wqkv, bqkv, wo, w1t, w2t, rowvecs = [], [], [], [], [], []
    for p in layer_params:
        wqkv.append(jnp.concatenate([p["wq"] * scale, p["wk"], p["wv"]], axis=0))
        bqkv.append(jnp.concatenate([p["bq"] * scale, p["bk"], p["bv"]], axis=0)[:, None])
        wo.append(p["wo"])
        w1t.append(p["w1"].T)
        w2t.append(p["w2"].T)
        rowvecs.append(jnp.stack(
            [pad(p["bo"]), pad(p["b1"]), pad(p["b2"]),
             pad(p["g1"]), pad(p["be1"]), pad(p["g2"]), pad(p["be2"]),
             jnp.zeros((W,), jnp.float32)], axis=0))

    return dict(
        wqkv=jnp.stack(wqkv).astype(compute_dtype),
        bqkv_col=jnp.stack(bqkv).astype(jnp.float32),
        wo=jnp.stack(wo).astype(compute_dtype),
        w1_t=jnp.stack(w1t).astype(compute_dtype),
        w2_t=jnp.stack(w2t).astype(compute_dtype),
        rowvecs=jnp.stack(rowvecs).astype(jnp.float32),
        final_ln=jnp.stack([final_gamma, final_beta], axis=0).astype(jnp.float32),
    )


def init_params(key, num_layers, d_model, ff_hidden):
    def nrm(k, shape, s=0.05):
        return s * jax.random.normal(k, shape, jnp.float32)

    layers = []
    for _ in range(num_layers):
        key, *ks = jax.random.split(key, 17)
        layers.append(dict(
            wq=nrm(ks[0], (d_model, d_model)), bq=nrm(ks[1], (d_model,)),
            wk=nrm(ks[2], (d_model, d_model)), bk=nrm(ks[3], (d_model,)),
            wv=nrm(ks[4], (d_model, d_model)), bv=nrm(ks[5], (d_model,)),
            wo=nrm(ks[6], (d_model, d_model)), bo=nrm(ks[7], (d_model,)),
            w1=nrm(ks[8], (ff_hidden, d_model)), b1=nrm(ks[9], (ff_hidden,)),
            w2=nrm(ks[10], (d_model, ff_hidden)), b2=nrm(ks[11], (d_model,)),
            g1=1.0 + nrm(ks[12], (d_model,), 0.1), be1=nrm(ks[13], (d_model,), 0.1),
            g2=1.0 + nrm(ks[14], (d_model,), 0.1), be2=nrm(ks[15], (d_model,), 0.1),
        ))
    key, k1, k2 = jax.random.split(key, 3)
    fg = 1.0 + 0.1 * jax.random.normal(k1, (d_model,), jnp.float32)
    fb = 0.1 * jax.random.normal(k2, (d_model,), jnp.float32)
    return layers, fg, fb


# ----------------------------- pure-JAX reference -------------------------------

def _ref_encoder(x, layers, fg, fb, num_heads):
    def ln(y, g, b):
        mu = y.mean(-1, keepdims=True)
        var = ((y - mu) ** 2).mean(-1, keepdims=True)
        return (y - mu) * lax.rsqrt(var + 1e-5) * g + b

    B, S, D = x.shape
    H = num_heads
    Dh = D // H
    for p in layers:
        q = jnp.einsum("bsd,od->bso", x, p["wq"]) + p["bq"]
        k = jnp.einsum("bsd,od->bso", x, p["wk"]) + p["bk"]
        v = jnp.einsum("bsd,od->bso", x, p["wv"]) + p["bv"]
        q = q.reshape(B, S, H, Dh).transpose(0, 2, 1, 3)
        k = k.reshape(B, S, H, Dh).transpose(0, 2, 1, 3)
        v = v.reshape(B, S, H, Dh).transpose(0, 2, 1, 3)
        s = jnp.einsum("bhqd,bhkd->bhqk", q, k) / math.sqrt(Dh)
        a = jax.nn.softmax(s, axis=-1)
        o = jnp.einsum("bhqk,bhkd->bhqd", a, v).transpose(0, 2, 1, 3).reshape(B, S, D)
        o = jnp.einsum("bsd,od->bso", o, p["wo"]) + p["bo"]
        x1 = ln(x + o, p["g1"], p["be1"])
        h = jnp.maximum(jnp.einsum("bsd,fd->bsf", x1, p["w1"]) + p["b1"], 0.0)
        ff = jnp.einsum("bsf,df->bsd", h, p["w2"]) + p["b2"]
        x = ln(x1 + ff, p["g2"], p["be2"])
    return ln(x, fg, fb)


# ----------------------------- main ---------------------------------------------

if __name__ == "__main__":
    num_layers, d_model, num_heads, ff_hidden = 2, 32, 4, 64
    B, S = 2, 8

    key = jax.random.PRNGKey(0)
    kx, kp = jax.random.split(key)
    x = jax.random.normal(kx, (B, S, d_model), jnp.float32)
    layers, fg, fb = init_params(kp, num_layers, d_model, ff_hidden)

    ref = _ref_encoder(x, layers, fg, fb, num_heads)

    # f32 weights, 2 batch blocks (exercises the parallel batch grid axis).
    packed_f32 = pack_params(layers, fg, fb, num_heads, jnp.float32)
    out_f32 = jax.block_until_ready(
        transformer_encoder(x, packed_f32, num_heads, block_b=1))
    assert out_f32.shape == (B, S, d_model)
    assert jnp.allclose(out_f32, ref, atol=5e-3, rtol=5e-3), (
        "f32 mismatch, max|diff|=%f" % float(jnp.max(jnp.abs(out_f32 - ref))))

    # bf16 weights (MXU-native storage), whole batch in one block.
    packed_bf16 = pack_params(layers, fg, fb, num_heads, jnp.bfloat16)
    out_bf16 = jax.block_until_ready(
        transformer_encoder(x, packed_bf16, num_heads, block_b=2))
    assert jnp.allclose(out_bf16, ref, atol=0.25, rtol=0.05), (
        "bf16 mismatch, max|diff|=%f" % float(jnp.max(jnp.abs(out_bf16 - ref))))

    print("KERNEL_OK")
</pallas_src>

<mosaic_0001>
module attributes {stable_mosaic.version = 11 : i64} {
  func.func @encoder_kernel(%arg0: i32, %arg1: i32, %arg2: memref<1x8x32xf32, #tpu.memory_space<vmem>>, %arg3: memref<1x96x32xf32, #tpu.memory_space<vmem>>, %arg4: memref<1x96x1xf32, #tpu.memory_space<vmem>>, %arg5: memref<1x32x32xf32, #tpu.memory_space<vmem>>, %arg6: memref<1x32x64xf32, #tpu.memory_space<vmem>>, %arg7: memref<1x64x32xf32, #tpu.memory_space<vmem>>, %arg8: memref<1x8x64xf32, #tpu.memory_space<vmem>>, %arg9: memref<2x32xf32, #tpu.memory_space<vmem>>, %arg10: memref<1x8x32xf32, #tpu.memory_space<vmem>>, %arg11: memref<8x32xf32, #tpu.memory_space<vmem>>) attributes {dimension_semantics = [#tpu.dimension_semantics<parallel>, #tpu.dimension_semantics<arbitrary>], iteration_bounds = array<i64: 2, 2>, scalar_prefetch = 0 : i64, scratch_operands = 1 : i64, tpu.core_type = #tpu.core_type<tc>, window_params = [{transform_indices = @transform_0, window_bounds = array<i64: 1, 8, 32>}, {transform_indices = @transform_1, window_bounds = array<i64: 1, 96, 32>}, {transform_indices = @transform_2, window_bounds = array<i64: 1, 96, 1>}, {transform_indices = @transform_3, window_bounds = array<i64: 1, 32, 32>}, {transform_indices = @transform_4, window_bounds = array<i64: 1, 32, 64>}, {transform_indices = @transform_5, window_bounds = array<i64: 1, 64, 32>}, {transform_indices = @transform_6, window_bounds = array<i64: 1, 8, 64>}, {pipeline_mode = #tpu.pipeline_mode<synchronous>, transform_indices = @transform_7, window_bounds = array<i64: 2, 32>}, {transform_indices = @transform_8, window_bounds = array<i64: 1, 8, 32>}]} {
    %c0_i32 = arith.constant 0 : i32
    %0 = arith.cmpi eq, %arg1, %c0_i32 : i32
    %1 = arith.extui %0 : i1 to i32
    %c0_i32_0 = arith.constant 0 : i32
    %2 = arith.cmpi ne, %1, %c0_i32_0 : i32
    scf.if %2 {
      %c0_41 = arith.constant 0 : index
      %c0_42 = arith.constant 0 : index
      %c0_43 = arith.constant 0 : index
      %106 = vector.load %arg2[%c0_41, %c0_42, %c0_43] : memref<1x8x32xf32, #tpu.memory_space<vmem>>, vector<1x8x32xf32>
      %107 = vector.shape_cast %106 : vector<1x8x32xf32> to vector<8x32xf32>
      %c0_44 = arith.constant 0 : index
      %c0_45 = arith.constant 0 : index
      %108 = vector.load %arg11[%c0_44, %c0_45] : memref<8x32xf32, #tpu.memory_space<vmem>>, vector<8x32xf32>
      tpu.vector_store %arg11[%c0_44, %c0_45], %107 {strides = array<i32>} : memref<8x32xf32, #tpu.memory_space<vmem>>, vector<8x32xf32>,
    } else {
    }
    %c0 = arith.constant 0 : index
    %c0_1 = arith.constant 0 : index
    %3 = vector.load %arg11[%c0, %c0_1] : memref<8x32xf32, #tpu.memory_space<vmem>>, vector<8x32xf32>
    %c0_2 = arith.constant 0 : index
    %c0_3 = arith.constant 0 : index
    %c0_4 = arith.constant 0 : index
    %4 = vector.load %arg8[%c0_2, %c0_3, %c0_4] : memref<1x8x64xf32, #tpu.memory_space<vmem>>, vector<1x8x64xf32>
    %5 = vector.shape_cast %4 : vector<1x8x64xf32> to vector<8x64xf32>
    %6 = vector.extract_strided_slice %5 {offsets = [0, 0], sizes = [1, 32], strides = [1, 1]} : vector<8x64xf32> to vector<1x32xf32>
    %7 = vector.extract_strided_slice %5 {offsets = [1, 0], sizes = [1, 64], strides = [1, 1]} : vector<8x64xf32> to vector<1x64xf32>
    %8 = vector.extract_strided_slice %5 {offsets = [2, 0], sizes = [1, 32], strides = [1, 1]} : vector<8x64xf32> to vector<1x32xf32>
    %9 = vector.extract_strided_slice %5 {offsets = [3, 0], sizes = [1, 32], strides = [1, 1]} : vector<8x64xf32> to vector<1x32xf32>
    %10 = vector.extract_strided_slice %5 {offsets = [4, 0], sizes = [1, 32], strides = [1, 1]} : vector<8x64xf32> to vector<1x32xf32>
    %11 = vector.extract_strided_slice %5 {offsets = [5, 0], sizes = [1, 32], strides = [1, 1]} : vector<8x64xf32> to vector<1x32xf32>
    %12 = vector.extract_strided_slice %5 {offsets = [6, 0], sizes = [1, 32], strides = [1, 1]} : vector<8x64xf32> to vector<1x32xf32>
    %c0_5 = arith.constant 0 : index
    %c0_6 = arith.constant 0 : index
    %c0_7 = arith.constant 0 : index
    %13 = vector.load %arg3[%c0_5, %c0_6, %c0_7] : memref<1x96x32xf32, #tpu.memory_space<vmem>>, vector<1x96x32xf32>
    %14 = vector.shape_cast %13 : vector<1x96x32xf32> to vector<96x32xf32>
    %cst = arith.constant dense<0.000000e+00> : vector<96x8xf32>
    %15 = tpu.matmul %14, %3, %cst {dimension_numbers = #tpu.dot_dimension_numbers<[1], [1], [0], [0], [0, 0, 1, 0], [], []>} : vector<96x32xf32>, vector<8x32xf32>, vector<96x8xf32> -> vector<96x8xf32>
    %c0_8 = arith.constant 0 : index
    %c0_9 = arith.constant 0 : index
    %c0_10 = arith.constant 0 : index
    %16 = vector.load %arg4[%c0_8, %c0_9, %c0_10] : memref<1x96x1xf32, #tpu.memory_space<vmem>>, vector<1x96x1xf32>
    %17 = vector.shape_cast %16 : vector<1x96x1xf32> to vector<96x1xf32>
    %18 = vector.broadcast %17 : vector<96x1xf32> to vector<96x8xf32>
    %19 = arith.addf %15, %18 : vector<96x8xf32>
    %20 = vector.extract_strided_slice %19 {offsets = [0, 0], sizes = [32, 8], strides = [1, 1]} : vector<96x8xf32> to vector<32x8xf32>
    %21 = vector.shape_cast %20 : vector<32x8xf32> to vector<4x8x8xf32>
    %22 = vector.extract_strided_slice %19 {offsets = [32, 0], sizes = [32, 8], strides = [1, 1]} : vector<96x8xf32> to vector<32x8xf32>
    %23 = vector.shape_cast %22 : vector<32x8xf32> to vector<4x8x8xf32>
    %24 = vector.extract_strided_slice %19 {offsets = [64, 0], sizes = [32, 8], strides = [1, 1]} : vector<96x8xf32> to vector<32x8xf32>
    %25 = vector.shape_cast %24 : vector<32x8xf32> to vector<4x8x8xf32>
    %cst_11 = arith.constant dense<0.000000e+00> : vector<4x8x8xf32>
    %26 = tpu.matmul %21, %23, %cst_11 {dimension_numbers = #tpu.dot_dimension_numbers<[1], [1], [2], [2], [0, 0, 0, 2, 1, 2], [0], [0]>} : vector<4x8x8xf32>, vector<4x8x8xf32>, vector<4x8x8xf32> -> vector<4x8x8xf32>
    %cst_12 = arith.constant dense<0xFF800000> : vector<4x8xf32>
    %27 = vector.multi_reduction <maximumf>, %26, %cst_12 [2] : vector<4x8x8xf32> to vector<4x8xf32>
    %28 = vector.shape_cast %27 : vector<4x8xf32> to vector<4x8x1xf32>
    %29 = vector.broadcast %28 : vector<4x8x1xf32> to vector<4x8x8xf32>
    %30 = arith.subf %26, %29 : vector<4x8x8xf32>
    %31 = math.exp %30 : vector<4x8x8xf32>
    %cst_13 = arith.constant dense<0.000000e+00> : vector<4x8xf32>
    %32 = vector.multi_reduction <add>, %31, %cst_13 [2] : vector<4x8x8xf32> to vector<4x8xf32>
    %33 = vector.shape_cast %32 : vector<4x8xf32> to vector<4x8x1xf32>
    %34 = tpu.reciprocal %33 {approx = true} : vector<4x8x1xf32> -> vector<4x8x1xf32>
    %35 = vector.broadcast %34 : vector<4x8x1xf32> to vector<4x8x8xf32>
    %36 = arith.mulf %31, %35 : vector<4x8x8xf32>
    %cst_14 = arith.constant dense<0.000000e+00> : vector<4x8x8xf32>
    %37 = tpu.matmul %25, %36, %cst_14 {dimension_numbers = #tpu.dot_dimension_numbers<[2], [2], [1], [1], [0, 0, 0, 1, 1, 1], [0], [0]>} : vector<4x8x8xf32>, vector<4x8x8xf32>, vector<4x8x8xf32> -> vector<4x8x8xf32>
    %38 = vector.shape_cast %37 : vector<4x8x8xf32> to vector<32x8xf32>
    %c0_15 = arith.constant 0 : index
    %c0_16 = arith.constant 0 : index
    %c0_17 = arith.constant 0 : index
    %39 = vector.load %arg5[%c0_15, %c0_16, %c0_17] : memref<1x32x32xf32, #tpu.memory_space<vmem>>, vector<1x32x32xf32>
    %40 = vector.shape_cast %39 : vector<1x32x32xf32> to vector<32x32xf32>
    %cst_18 = arith.constant dense<0.000000e+00> : vector<8x32xf32>
    %41 = tpu.matmul %38, %40, %cst_18 {dimension_numbers = #tpu.dot_dimension_numbers<[0], [1], [1], [0], [0, 1, 1, 0], [], []>} : vector<32x8xf32>, vector<32x32xf32>, vector<8x32xf32> -> vector<8x32xf32>
    %42 = vector.broadcast %6 : vector<1x32xf32> to vector<8x32xf32>
    %43 = arith.addf %41, %42 : vector<8x32xf32>
    %44 = arith.addf %3, %43 : vector<8x32xf32>
    %cst_19 = arith.constant dense<0.000000e+00> : vector<8xf32>
    %45 = vector.multi_reduction <add>, %44, %cst_19 [1] : vector<8x32xf32> to vector<8xf32>
    %46 = vector.shape_cast %45 : vector<8xf32> to vector<8x1xf32>
    %cst_20 = arith.constant 3.200000e+01 : f32
    %47 = vector.broadcast %cst_20 : f32 to vector<8x1xf32>
    %48 = arith.divf %46, %47 : vector<8x1xf32>
    %49 = vector.broadcast %48 : vector<8x1xf32> to vector<8x32xf32>
    %50 = arith.subf %44, %49 : vector<8x32xf32>
    %51 = arith.mulf %50, %50 : vector<8x32xf32>
    %cst_21 = arith.constant dense<0.000000e+00> : vector<8xf32>
    %52 = vector.multi_reduction <add>, %51, %cst_21 [1] : vector<8x32xf32> to vector<8xf32>
    %53 = vector.shape_cast %52 : vector<8xf32> to vector<8x1xf32>
    %cst_22 = arith.constant 3.200000e+01 : f32
    %54 = vector.broadcast %cst_22 : f32 to vector<8x1xf32>
    %55 = arith.divf %53, %54 : vector<8x1xf32>
    %56 = vector.broadcast %48 : vector<8x1xf32> to vector<8x32xf32>
    %57 = arith.subf %44, %56 : vector<8x32xf32>
    %cst_23 = arith.constant 9.99999974E-6 : f32
    %58 = vector.broadcast %cst_23 : f32 to vector<8x1xf32>
    %59 = arith.addf %55, %58 : vector<8x1xf32>
    %60 = math.rsqrt %59 : vector<8x1xf32>
    %61 = vector.broadcast %60 : vector<8x1xf32> to vector<8x32xf32>
    %62 = arith.mulf %57, %61 : vector<8x32xf32>
    %63 = vector.broadcast %9 : vector<1x32xf32> to vector<8x32xf32>
    %64 = arith.mulf %62, %63 : vector<8x32xf32>
    %65 = vector.broadcast %10 : vector<1x32xf32> to vector<8x32xf32>
    %66 = arith.addf %64, %65 : vector<8x32xf32>
    %c0_24 = arith.constant 0 : index
    %c0_25 = arith.constant 0 : index
    %c0_26 = arith.constant 0 : index
    %67 = vector.load %arg6[%c0_24, %c0_25, %c0_26] : memref<1x32x64xf32, #tpu.memory_space<vmem>>, vector<1x32x64xf32>
    %68 = vector.shape_cast %67 : vector<1x32x64xf32> to vector<32x64xf32>
    %cst_27 = arith.constant dense<0.000000e+00> : vector<8x64xf32>
    %69 = tpu.matmul %66, %68, %cst_27 {dimension_numbers = #tpu.dot_dimension_numbers<[1], [0], [0], [1], [0, 0, 1, 1], [], []>} : vector<8x32xf32>, vector<32x64xf32>, vector<8x64xf32> -> vector<8x64xf32>
    %70 = vector.broadcast %7 : vector<1x64xf32> to vector<8x64xf32>
    %71 = arith.addf %69, %70 : vector<8x64xf32>
    %cst_28 = arith.constant 0.000000e+00 : f32
    %72 = vector.broadcast %cst_28 : f32 to vector<8x64xf32>
    %73 = arith.maximumf %71, %72 : vector<8x64xf32>
    %c0_29 = arith.constant 0 : index
    %c0_30 = arith.constant 0 : index
    %c0_31 = arith.constant 0 : index
    %74 = vector.load %arg7[%c0_29, %c0_30, %c0_31] : memref<1x64x32xf32, #tpu.memory_space<vmem>>, vector<1x64x32xf32>
    %75 = vector.shape_cast %74 : vector<1x64x32xf32> to vector<64x32xf32>
    %cst_32 = arith.constant dense<0.000000e+00> : vector<8x32xf32>
    %76 = tpu.matmul %73, %75, %cst_32 {dimension_numbers = #tpu.dot_dimension_numbers<[1], [0], [0], [1], [0, 0, 1, 1], [], []>} : vector<8x64xf32>, vector<64x32xf32>, vector<8x32xf32> -> vector<8x32xf32>
    %77 = vector.broadcast %8 : vector<1x32xf32> to vector<8x32xf32>
    %78 = arith.addf %76, %77 : vector<8x32xf32>
    %79 = arith.addf %66, %78 : vector<8x32xf32>
    %cst_33 = arith.constant dense<0.000000e+00> : vector<8xf32>
    %80 = vector.multi_reduction <add>, %79, %cst_33 [1] : vector<8x32xf32> to vector<8xf32>
    %81 = vector.shape_cast %80 : vector<8xf32> to vector<8x1xf32>
    %cst_34 = arith.constant 3.200000e+01 : f32
    %82 = vector.broadcast %cst_34 : f32 to vector<8x1xf32>
    %83 = arith.divf %81, %82 : vector<8x1xf32>
    %84 = vector.broadcast %83 : vector<8x1xf32> to vector<8x32xf32>
    %85 = arith.subf %79, %84 : vector<8x32xf32>
    %86 = arith.mulf %85, %85 : vector<8x32xf32>
    %cst_35 = arith.constant dense<0.000000e+00> : vector<8xf32>
    %87 = vector.multi_reduction <add>, %86, %cst_35 [1] : vector<8x32xf32> to vector<8xf32>
    %88 = vector.shape_cast %87 : vector<8xf32> to vector<8x1xf32>
    %cst_36 = arith.constant 3.200000e+01 : f32
    %89 = vector.broadcast %cst_36 : f32 to vector<8x1xf32>
    %90 = arith.divf %88, %89 : vector<8x1xf32>
    %91 = vector.broadcast %83 : vector<8x1xf32> to vector<8x32xf32>
    %92 = arith.subf %79, %91 : vector<8x32xf32>
    %cst_37 = arith.constant 9.99999974E-6 : f32
    %93 = vector.broadcast %cst_37 : f32 to vector<8x1xf32>
    %94 = arith.addf %90, %93 : vector<8x1xf32>
    %95 = math.rsqrt %94 : vector<8x1xf32>
    %96 = vector.broadcast %95 : vector<8x1xf32> to vector<8x32xf32>
    %97 = arith.mulf %92, %96 : vector<8x32xf32>
    %98 = vector.broadcast %11 : vector<1x32xf32> to vector<8x32xf32>
    %99 = arith.mulf %97, %98 : vector<8x32xf32>
    %100 = vector.broadcast %12 : vector<1x32xf32> to vector<8x32xf32>
    %101 = arith.addf %99, %100 : vector<8x32xf32>
    %c0_38 = arith.constant 0 : index
    %c0_39 = arith.constant 0 : index
    %102 = vector.load %arg11[%c0_38, %c0_39] : memref<8x32xf32, #tpu.memory_space<vmem>>, vector<8x32xf32>
    tpu.vector_store %arg11[%c0_38, %c0_39], %101 {strides = array<i32>} : memref<8x32xf32, #tpu.memory_space<vmem>>, vector<8x32xf32>,
    %c1_i32 = arith.constant 1 : i32
    %103 = arith.cmpi eq, %arg1, %c1_i32 : i32
    %104 = arith.extui %103 : i1 to i32
    %c0_i32_40 = arith.constant 0 : i32
    %105 = arith.cmpi ne, %104, %c0_i32_40 : i32
    scf.if %105 {
      %c0_41 = arith.constant 0 : index
      %c0_42 = arith.constant 0 : index
      %106 = vector.load %arg9[%c0_41, %c0_42] : memref<2x32xf32, #tpu.memory_space<vmem>>, vector<2x32xf32>
      %107 = vector.extract_strided_slice %106 {offsets = [0, 0], sizes = [1, 32], strides = [1, 1]} : vector<2x32xf32> to vector<1x32xf32>
      %108 = vector.extract_strided_slice %106 {offsets = [1, 0], sizes = [1, 32], strides = [1, 1]} : vector<2x32xf32> to vector<1x32xf32>
      %cst_43 = arith.constant dense<0.000000e+00> : vector<8xf32>
      %109 = vector.multi_reduction <add>, %101, %cst_43 [1] : vector<8x32xf32> to vector<8xf32>
      %110 = vector.shape_cast %109 : vector<8xf32> to vector<8x1xf32>
      %cst_44 = arith.constant 3.200000e+01 : f32
      %111 = vector.broadcast %cst_44 : f32 to vector<8x1xf32>
      %112 = arith.divf %110, %111 : vector<8x1xf32>
      %113 = vector.broadcast %112 : vector<8x1xf32> to vector<8x32xf32>
      %114 = arith.subf %101, %113 : vector<8x32xf32>
      %115 = arith.mulf %114, %114 : vector<8x32xf32>
      %cst_45 = arith.constant dense<0.000000e+00> : vector<8xf32>
      %116 = vector.multi_reduction <add>, %115, %cst_45 [1] : vector<8x32xf32> to vector<8xf32>
      %117 = vector.shape_cast %116 : vector<8xf32> to vector<8x1xf32>
      %cst_46 = arith.constant 3.200000e+01 : f32
      %118 = vector.broadcast %cst_46 : f32 to vector<8x1xf32>
      %119 = arith.divf %117, %118 : vector<8x1xf32>
      %120 = vector.broadcast %112 : vector<8x1xf32> to vector<8x32xf32>
      %121 = arith.subf %101, %120 : vector<8x32xf32>
      %cst_47 = arith.constant 9.99999974E-6 : f32
      %122 = vector.broadcast %cst_47 : f32 to vector<8x1xf32>
      %123 = arith.addf %119, %122 : vector<8x1xf32>
      %124 = math.rsqrt %123 : vector<8x1xf32>
      %125 = vector.broadcast %124 : vector<8x1xf32> to vector<8x32xf32>
      %126 = arith.mulf %121, %125 : vector<8x32xf32>
      %127 = vector.broadcast %107 : vector<1x32xf32> to vector<8x32xf32>
      %128 = arith.mulf %126, %127 : vector<8x32xf32>
      %129 = vector.broadcast %108 : vector<1x32xf32> to vector<8x32xf32>
      %130 = arith.addf %128, %129 : vector<8x32xf32>
      %131 = vector.shape_cast %130 : vector<8x32xf32> to vector<1x8x32xf32>
      %c0_48 = arith.constant 0 : index
      %c0_49 = arith.constant 0 : index
      %c0_50 = arith.constant 0 : index
      %132 = vector.load %arg10[%c0_48, %c0_49, %c0_50] : memref<1x8x32xf32, #tpu.memory_space<vmem>>, vector<1x8x32xf32>
      tpu.vector_store %arg10[%c0_48, %c0_49, %c0_50], %131 {strides = array<i32>} : memref<1x8x32xf32, #tpu.memory_space<vmem>>, vector<1x8x32xf32>,
    } else {
    }
    return
  }
  func.func @transform_0(%arg0: i32, %arg1: i32) -> (i32, i32, i32) {
    %c0_i32 = arith.constant 0 : i32
    %c0_i32_0 = arith.constant 0 : i32
    %c0_i32_1 = arith.constant 0 : i32
    return %arg0, %c0_i32, %c0_i32_0 : i32, i32, i32
  }
  func.func @transform_1(%arg0: i32, %arg1: i32) -> (i32, i32, i32) {
    %c0_i32 = arith.constant 0 : i32
    %c0_i32_0 = arith.constant 0 : i32
    %c0_i32_1 = arith.constant 0 : i32
    return %arg1, %c0_i32, %c0_i32_0 : i32, i32, i32
  }
  func.func @transform_2(%arg0: i32, %arg1: i32) -> (i32, i32, i32) {
    %c0_i32 = arith.constant 0 : i32
    %c0_i32_0 = arith.constant 0 : i32
    %c0_i32_1 = arith.constant 0 : i32
    return %arg1, %c0_i32, %c0_i32_0 : i32, i32, i32
  }
  func.func @transform_3(%arg0: i32, %arg1: i32) -> (i32, i32, i32) {
    %c0_i32 = arith.constant 0 : i32
    %c0_i32_0 = arith.constant 0 : i32
    %c0_i32_1 = arith.constant 0 : i32
    return %arg1, %c0_i32, %c0_i32_0 : i32, i32, i32
  }
  func.func @transform_4(%arg0: i32, %arg1: i32) -> (i32, i32, i32) {
    %c0_i32 = arith.constant 0 : i32
    %c0_i32_0 = arith.constant 0 : i32
    %c0_i32_1 = arith.constant 0 : i32
    return %arg1, %c0_i32, %c0_i32_0 : i32, i32, i32
  }
  func.func @transform_5(%arg0: i32, %arg1: i32) -> (i32, i32, i32) {
    %c0_i32 = arith.constant 0 : i32
    %c0_i32_0 = arith.constant 0 : i32
    %c0_i32_1 = arith.constant 0 : i32
    return %arg1, %c0_i32, %c0_i32_0 : i32, i32, i32
  }
  func.func @transform_6(%arg0: i32, %arg1: i32) -> (i32, i32, i32) {
    %c0_i32 = arith.constant 0 : i32
    %c0_i32_0 = arith.constant 0 : i32
    %c0_i32_1 = arith.constant 0 : i32
    return %arg1, %c0_i32, %c0_i32_0 : i32, i32, i32
  }
  func.func @transform_7(%arg0: i32, %arg1: i32) -> (i32, i32) {
    %c0_i32 = arith.constant 0 : i32
    %c0_i32_0 = arith.constant 0 : i32
    %c0_i32_1 = arith.constant 0 : i32
    return %c0_i32, %c0_i32_0 : i32, i32
  }
  func.func @transform_8(%arg0: i32, %arg1: i32) -> (i32, i32, i32) {
    %c0_i32 = arith.constant 0 : i32
    %c0_i32_0 = arith.constant 0 : i32
    %c0_i32_1 = arith.constant 0 : i32
    return %arg0, %c0_i32, %c0_i32_0 : i32, i32, i32
  }
}

</mosaic_0001>

<llo_original>
// kernel: tpu_custom_call.1
$region0: #{tpu_custom_call.1}
  #allocation0 [shape = 'u32[]', space=smem, size = 0x4, offset = 0x4, fixed_abs, tag = 'smem constant byte address 0x4 - core index']
  #allocation1 [shape = 'u32[144,128]{1,0:T(1,128)}', space=vmem, size = 0x12000, scoped, tag = 'internal scratch']
  #allocation2 [shape = 'f32[8,32]{1,0:T(8,128)}', space=vmem, size = 0x1000, scoped, tag = 'scratch operand']
  %s0 = inlined_call_operand.hbm [shape: f32[2,8,32], index: 0, kind: input, shape index: {}]
  %s1 = inlined_call_operand.hbm [shape: f32[2,96,32], index: 1, kind: input, shape index: {}]
  %s2 = inlined_call_operand.hbm [shape: f32[2,96,1], index: 2, kind: input, shape index: {}]
  %s3 = inlined_call_operand.hbm [shape: f32[2,32,32], index: 3, kind: input, shape index: {}]
  %s4 = inlined_call_operand.hbm [shape: f32[2,32,64], index: 4, kind: input, shape index: {}]
  %s5 = inlined_call_operand.hbm [shape: f32[2,64,32], index: 5, kind: input, shape index: {}]
  %s6 = inlined_call_operand.hbm [shape: f32[2,8,64], index: 6, kind: input, shape index: {}]
  %s7 = inlined_call_operand.hbm [shape: f32[2,32], index: 7, kind: input, shape index: {}]
  %s8 = inlined_call_operand.hbm [shape: f32[2,8,32], index: 8, kind: output, shape index: {}]
  %s9 = sld [smem:[#allocation0]]
  $region105: #{tpu_custom_call.1} parent=0
    _
  %s11 = ssub.s32 1, %s9
  %s12 = scalar_select 0, %s11, %s9
  $region1: #{tpu_custom_call.1} parent=0
    #allocation3 [shape = 'u8[8192]{0}', space=vmem, size = 0x2000, scoped, tag = 'input window, operand 0']
    #allocation4 [shape = 's32[2]{0}', space=sflag, size = 0x8, scoped, tag = 'scoped memory for tpu_custom_call.1']
    #allocation5 [shape = 's32[2]{0}', space=sflag, size = 0x8, scoped, tag = 'scoped memory for tpu_custom_call.1']
    #allocation6 [shape = 'u8[98304]{0}', space=vmem, size = 0x18000, scoped, tag = 'input window, operand 1']
    #allocation7 [shape = 's32[2]{0}', space=sflag, size = 0x8, scoped, tag = 'scoped memory for tpu_custom_call.1']
    #allocation8 [shape = 'u8[98304]{0}', space=vmem, size = 0x18000, scoped, tag = 'input window, operand 2']
    #allocation9 [shape = 'u8[32768]{0}', space=vmem, size = 0x8000, scoped, tag = 'input window, operand 3']
    #allocation10 [shape = 's32[2]{0}', space=sflag, size = 0x8, scoped, tag = 'scoped memory for tpu_custom_call.1']
    #allocation11 [shape = 'u8[32768]{0}', space=vmem, size = 0x8000, scoped, tag = 'input window, operand 4']
    #allocation12 [shape = 'u8[65536]{0}', space=vmem, size = 0x10000, scoped, tag = 'input window, operand 5']
    #allocation13 [shape = 's32[2]{0}', space=sflag, size = 0x8, scoped, tag = 'scoped memory for tpu_custom_call.1']
    #allocation14 [shape = 'u8[8192]{0}', space=vmem, size = 0x2000, scoped, tag = 'input window, operand 6']
    #allocation15 [shape = 'u8[1024]{0}', space=vmem, size = 0x400, scoped, tag = 'input window, operand 7, single buffered']
    #allocation16 [shape = 's32[1]{0}', space=sflag, size = 0x4, scoped, tag = 'scoped memory for tpu_custom_call.1']
    #allocation17 [shape = 'u8[8192]{0}', space=vmem, size = 0x2000, scoped, tag = 'output window, operand 0']
    %13 = vsyncpa [#allocation4], 0
    %s14 = scalar_lea.sflag [#allocation4], 1
    %15 = vsyncpa %s14, 0
    %16 = vsyncpa [#allocation7], 0
    %s17 = scalar_lea.sflag [#allocation7], 1
    %18 = vsyncpa %s17, 0
    %19 = vsyncpa [#allocation10], 0
    %s20 = scalar_lea.sflag [#allocation10], 1
    %21 = vsyncpa %s20, 0
    %22 = vsyncpa [#allocation13], 0
    %s23 = scalar_lea.sflag [#allocation13], 1
    %24 = vsyncpa %s23, 0
    %25 = vsyncpa [#allocation16], 0
    %26 = vsyncpa [#allocation5], 0
    %s27 = scalar_lea.sflag [#allocation5], 1
    %28 = vsyncpa %s27, 0
    loop: start=0, step=1, limit=6
    $region2: #{tpu_custom_call.1} parent=1 // loop_pre_header
      _
    $region3: #{tpu_custom_call.1} parent=1 // loop_header
      %s30 = sphi 0, %s34
      %p31 = scmp.ge.s32.totalorder %s30, 6
      %s37 = sphi 0, %s49
      %s38 = sphi 0, %s45
      %s39 = sphi 0, %s37
      %s40 = sphi 0, %s38
      %s41 = sphi 0, %s39
      %s42 = sphi 0, %s40
      %s52 = sphi 0, %s54
      %s55 = sphi 0, %s52
      %s56 = sphi 0, %s55
      %s72 = sphi 0, %s56
      %s78 = sphi 0, %s80
      %s81 = sphi 0, %s78
      %s82 = sphi 0, %s81
      %s98 = sphi 0, %s82
      %s104 = sphi 0, %s106
      %s107 = sphi 0, %s104
      %s108 = sphi 0, %s107
      %s124 = sphi 0, %s108
      %s130 = sphi 0, %s132
      %s133 = sphi 0, %s130
      %s134 = sphi 0, %s133
      %s150 = sphi 0, %s134
      %s156 = sphi 0, %s158
      %s159 = sphi 0, %s156
      %s160 = sphi 0, %s159
      %s176 = sphi 0, %s160
      %s182 = sphi 0, %s184
      %s185 = sphi 0, %s182
      %s186 = sphi 0, %s185
      %s202 = sphi 0, %s186
      %s208 = sphi 0, %s210
      %s211 = sphi 0, %s208
      %s212 = sphi 0, %s211
      %s228 = sphi 0, %s212
      %s232 = sphi 0, %s232
      %s234 = sphi 0, %s232
      %s235 = sphi 0, %s234
      %s249 = sphi 0, %s235
      %s255 = sphi 0, %s257
      %s258 = sphi 0, %s255
      %s259 = sphi 0, %s258
      %s275 = sphi 0, %s259
    $region4: #{tpu_custom_call.1} parent=1 // loop_header_branch
      %33 = sbr.rel (%p31) target = $region8
    $region5: #{tpu_custom_call.1} parent=1 // loop_body
      %s35 = ssub.s32 %s30, 1
      %s36 = ssub.s32 %s30, 2
      %s43 = sadd.s32 1, %s38
      %p44 = scmp.ge.s32.totalorder %s43, 2
      %s45 = scalar_select %p44, 0, %s43
      %s46 = sadd.s32 1, %s37
      %s47 = scalar_select %p44, %s46, %s37
      %p48 = scmp.ge.s32.totalorder %s47, 2
      %s49 = scalar_select %p48, 0, %s47
      %s50 = ssub.s32 %s37, %s49
      %p51 = scmp.eq.s32.totalorder %s50, 0
      %s53 = sadd.s32 %s52, 1
      %s54 = scalar_select %p51, %s52, %s53
      %p57 = pneg %p51
      %p58 = scmp.eq.s32.totalorder %s30, 3
      %p59 = por %p57, %p58
      %p60 = scmp.ne.s32.totalorder %s52, %s55
      %p61 = scmp.eq.s32.totalorder %s30, 0
      %p62 = por %p60, %p61
      %p63 = scmp.ne.s32.totalorder %s52, %s55
      %p64 = scmp.eq.s32.totalorder %s35, 3
      %p65 = por %p63, %p64
      %p66 = scmp.ne.s32.totalorder %s55, %s56
      %p67 = scmp.eq.s32.totalorder %s35, 0
      %p68 = por %p66, %p67
      %p69 = scmp.ne.s32.totalorder %s55, %s56
      %p70 = scmp.eq.s32.totalorder %s36, 3
      %p71 = por %p69, %p70
      %p73 = scmp.ne.s32.totalorder %s56, %s72
      %p74 = scmp.eq.s32.totalorder %s36, 0
      %p75 = por %p73, %p74
      %s76 = ssub.s32 %s38, %s45
      %p77 = scmp.eq.s32.totalorder %s76, 0
      %s79 = sadd.s32 %s78, 1
      %s80 = scalar_select %p77, %s78, %s79
      %p83 = pneg %p77
      %p84 = scmp.eq.s32.totalorder %s30, 3
      %p85 = por %p83, %p84
      %p86 = scmp.ne.s32.totalorder %s78, %s81
      %p87 = scmp.eq.s32.totalorder %s30, 0
      %p88 = por %p86, %p87
      %p89 = scmp.ne.s32.totalorder %s78, %s81
      %p90 = scmp.eq.s32.totalorder %s35, 3
      %p91 = por %p89, %p90
      %p92 = scmp.ne.s32.totalorder %s81, %s82
      %p93 = scmp.eq.s32.totalorder %s35, 0
      %p94 = por %p92, %p93
      %p95 = scmp.ne.s32.totalorder %s81, %s82
      %p96 = scmp.eq.s32.totalorder %s36, 3
      %p97 = por %p95, %p96
      %p99 = scmp.ne.s32.totalorder %s82, %s98
      %p100 = scmp.eq.s32.totalorder %s36, 0
      %p101 = por %p99, %p100
      %s102 = ssub.s32 %s38, %s45
      %p103 = scmp.eq.s32.totalorder %s102, 0
      %s105 = sadd.s32 %s104, 1
      %s106 = scalar_select %p103, %s104, %s105
      %p109 = pneg %p103
      %p110 = scmp.eq.s32.totalorder %s30, 3
      %p111 = por %p109, %p110
      %p112 = scmp.ne.s32.totalorder %s104, %s107
      %p113 = scmp.eq.s32.totalorder %s30, 0
      %p114 = por %p112, %p113
      %p115 = scmp.ne.s32.totalorder %s104, %s107
      %p116 = scmp.eq.s32.totalorder %s35, 3
      %p117 = por %p115, %p116
      %p118 = scmp.ne.s32.totalorder %s107, %s108
      %p119 = scmp.eq.s32.totalorder %s35, 0
      %p120 = por %p118, %p119
      %p121 = scmp.ne.s32.totalorder %s107, %s108
      %p122 = scmp.eq.s32.totalorder %s36, 3
      %p123 = por %p121, %p122
      %p125 = scmp.ne.s32.totalorder %s108, %s124
      %p126 = scmp.eq.s32.totalorder %s36, 0
      %p127 = por %p125, %p126
      %s128 = ssub.s32 %s38, %s45
      %p129 = scmp.eq.s32.totalorder %s128, 0
      %s131 = sadd.s32 %s130, 1
      %s132 = scalar_select %p129, %s130, %s131
      %p135 = pneg %p129
      %p136 = scmp.eq.s32.totalorder %s30, 3
      %p137 = por %p135, %p136
      %p138 = scmp.ne.s32.totalorder %s130, %s133
      %p139 = scmp.eq.s32.totalorder %s30, 0
      %p140 = por %p138, %p139
      %p141 = scmp.ne.s32.totalorder %s130, %s133
      %p142 = scmp.eq.s32.totalorder %s35, 3
      %p143 = por %p141, %p142
      %p144 = scmp.ne.s32.totalorder %s133, %s134
      %p145 = scmp.eq.s32.totalorder %s35, 0
      %p146 = por %p144, %p145
      %p147 = scmp.ne.s32.totalorder %s133, %s134
      %p148 = scmp.eq.s32.totalorder %s36, 3
      %p149 = por %p147, %p148
      %p151 = scmp.ne.s32.totalorder %s134, %s150
      %p152 = scmp.eq.s32.totalorder %s36, 0
      %p153 = por %p151, %p152
      %s154 = ssub.s32 %s38, %s45
      %p155 = scmp.eq.s32.totalorder %s154, 0
      %s157 = sadd.s32 %s156, 1
      %s158 = scalar_select %p155, %s156, %s157
      %p161 = pneg %p155
      %p162 = scmp.eq.s32.totalorder %s30, 3
      %p163 = por %p161, %p162
      %p164 = scmp.ne.s32.totalorder %s156, %s159
      %p165 = scmp.eq.s32.totalorder %s30, 0
      %p166 = por %p164, %p165
      %p167 = scmp.ne.s32.totalorder %s156, %s159
      %p168 = scmp.eq.s32.totalorder %s35, 3
      %p169 = por %p167, %p168
      %p170 = scmp.ne.s32.totalorder %s159, %s160
      %p171 = scmp.eq.s32.totalorder %s35, 0
      %p172 = por %p170, %p171
      %p173 = scmp.ne.s32.totalorder %s159, %s160
      %p174 = scmp.eq.s32.totalorder %s36, 3
      %p175 = por %p173, %p174
      %p177 = scmp.ne.s32.totalorder %s160, %s176
      %p178 = scmp.eq.s32.totalorder %s36, 0
      %p179 = por %p177, %p178
      %s180 = ssub.s32 %s38, %s45
      %p181 = scmp.eq.s32.totalorder %s180, 0
      %s183 = sadd.s32 %s182, 1
      %s184 = scalar_select %p181, %s182, %s183
      %p187 = pneg %p181
      %p188 = scmp.eq.s32.totalorder %s30, 3
      %p189 = por %p187, %p188
      %p190 = scmp.ne.s32.totalorder %s182, %s185
      %p191 = scmp.eq.s32.totalorder %s30, 0
      %p192 = por %p190, %p191
      %p193 = scmp.ne.s32.totalorder %s182, %s185
      %p194 = scmp.eq.s32.totalorder %s35, 3
      %p195 = por %p193, %p194
      %p196 = scmp.ne.s32.totalorder %s185, %s186
      %p197 = scmp.eq.s32.totalorder %s35, 0
      %p198 = por %p196, %p197
      %p199 = scmp.ne.s32.totalorder %s185, %s186
      %p200 = scmp.eq.s32.totalorder %s36, 3
      %p201 = por %p199, %p200
      %p203 = scmp.ne.s32.totalorder %s186, %s202
      %p204 = scmp.eq.s32.totalorder %s36, 0
      %p205 = por %p203, %p204
      %s206 = ssub.s32 %s38, %s45
      %p207 = scmp.eq.s32.totalorder %s206, 0
      %s209 = sadd.s32 %s208, 1
      %s210 = scalar_select %p207, %s208, %s209
      %p213 = pneg %p207
      %p214 = scmp.eq.s32.totalorder %s30, 3
      %p215 = por %p213, %p214
      %p216 = scmp.ne.s32.totalorder %s208, %s211
      %p217 = scmp.eq.s32.totalorder %s30, 0
      %p218 = por %p216, %p217
      %p219 = scmp.ne.s32.totalorder %s208, %s211
      %p220 = scmp.eq.s32.totalorder %s35, 3
      %p221 = por %p219, %p220
      %p222 = scmp.ne.s32.totalorder %s211, %s212
      %p223 = scmp.eq.s32.totalorder %s35, 0
      %p224 = por %p222, %p223
      %p225 = scmp.ne.s32.totalorder %s211, %s212
      %p226 = scmp.eq.s32.totalorder %s36, 3
      %p227 = por %p225, %p226
      %p229 = scmp.ne.s32.totalorder %s212, %s228
      %p230 = scmp.eq.s32.totalorder %s36, 0
      %p231 = por %p229, %p230
      %s233 = sadd.s32 %s232, 1
      %p236 = scmp.eq.s32.totalorder %s30, 3
      %p237 = scmp.ne.s32.totalorder %s232, %s234
      %p238 = scmp.eq.s32.totalorder %s30, 0
      %p239 = por %p237, %p238
      %p240 = scmp.ne.s32.totalorder %s232, %s234
      %p241 = scmp.eq.s32.totalorder %s35, 3
      %p242 = por %p240, %p241
      %p243 = scmp.ne.s32.totalorder %s234, %s235
      %p244 = scmp.eq.s32.totalorder %s35, 0
      %p245 = por %p243, %p244
      %p246 = scmp.ne.s32.totalorder %s234, %s235
      %p247 = scmp.eq.s32.totalorder %s36, 3
      %p248 = por %p246, %p247
      %p250 = scmp.ne.s32.totalorder %s235, %s249
      %p251 = scmp.eq.s32.totalorder %s36, 0
      %p252 = por %p250, %p251
      %s253 = ssub.s32 %s37, %s49
      %p254 = scmp.eq.s32.totalorder %s253, 0
      %s256 = sadd.s32 %s255, 1
      %s257 = scalar_select %p254, %s255, %s256
      %p260 = pneg %p254
      %p261 = scmp.eq.s32.totalorder %s30, 3
      %p262 = por %p260, %p261
      %p263 = scmp.ne.s32.totalorder %s255, %s258
      %p264 = scmp.eq.s32.totalorder %s30, 0
      %p265 = por %p263, %p264
      %p266 = scmp.ne.s32.totalorder %s255, %s258
      %p267 = scmp.eq.s32.totalorder %s35, 3
      %p268 = por %p266, %p267
      %p269 = scmp.ne.s32.totalorder %s258, %s259
      %p270 = scmp.eq.s32.totalorder %s35, 0
      %p271 = por %p269, %p270
      %p272 = scmp.ne.s32.totalorder %s258, %s259
      %p273 = scmp.eq.s32.totalorder %s36, 3
      %p274 = por %p272, %p273
      %p276 = scmp.ne.s32.totalorder %s259, %s275
      %p277 = scmp.eq.s32.totalorder %s36, 0
      %p278 = por %p276, %p277
      %p279 = scmp.le.s32.totalorder 1, %s30
      %p280 = scmp.lt.s32.totalorder %s30, 5
      %p281 = pnand %p279, %p280
      %p282 = pneg %p281
      // Predicated region
      $region9: #{tpu_custom_call.1} parent=5 // pred_check
        _
      $region10: #{tpu_custom_call.1} parent=5 // pred_check_branch
        %284 = sbr.rel (%p281) target = $region12
      $region11: #{tpu_custom_call.1} parent=5 // pred_region
        %s285 = ssub.s32 %s30, 1
        // Predicated region
        $region13: #{tpu_custom_call.1} parent=11 // pred_check
          %p286 = pneg %p245
        $region14: #{tpu_custom_call.1} parent=11 // pred_check_branch
          %288 = sbr.rel (%p286) target = $region16
        $region15: #{tpu_custom_call.1} parent=11 // pred_region
          %s290 = ssub.s32 32, 32
          %291 = vsyncadd [#allocation16], %s290
          %s293 = sshll.u32 [#allocation15], 4
          %s294 = int_to_ptr.vmem [resolvable:$true] %s293
          %296 = dma.hbm_to_vmem [thread:$0]  %s7, 32, %s294, [#allocation16]
        $region16: #{tpu_custom_call.1} parent=11 // pred_fallthru
          _
      $region12: #{tpu_custom_call.1} parent=5 // pred_fallthru
        _
      %p297 = scmp.lt.s32.totalorder %s30, 4
      // Predicated region
      $region17: #{tpu_custom_call.1} parent=5 // pred_check
        %p298 = pneg %p297
      $region18: #{tpu_custom_call.1} parent=5 // pred_check_branch
        %300 = sbr.rel (%p298) target = $region20
      $region19: #{tpu_custom_call.1} parent=5 // pred_region
        // Predicated region
        $region21: #{tpu_custom_call.1} parent=19 // pred_check
          %p301 = pneg %p62
        $region22: #{tpu_custom_call.1} parent=19 // pred_check_branch
          %303 = sbr.rel (%p301) target = $region24
        $region23: #{tpu_custom_call.1} parent=19 // pred_region
          %s304 = sand.u32 %s52, 1
          %s305 = scalar_lea.sflag [#allocation4], %s304
          %s306 = sand.u32 %s52, 1
          %s307 = smul.addr %s306, 8
          %s308 = scalar_lea.vmem [#allocation3], %s307
          %s310 = ssub.s32 128, 128
          %311 = vsyncadd %s305, %s310
          %s312 = smul.addr %s37, 128
          %s313 = scalar_lea.hbm %s0, %s312
          %s315 = sshll.u32 %s308, 4
          %s316 = int_to_ptr.vmem [resolvable:$true] %s315
          %318 = dma.hbm_to_vmem [thread:$0]  %s313, 128, %s316, %s305
        $region24: #{tpu_custom_call.1} parent=19 // pred_fallthru
          _
        // Predicated region
        $region25: #{tpu_custom_call.1} parent=19 // pred_check
          %p319 = pneg %p88
        $region26: #{tpu_custom_call.1} parent=19 // pred_check_branch
          %321 = sbr.rel (%p319) target = $region28
        $region27: #{tpu_custom_call.1} parent=19 // pred_region
          %s322 = sand.u32 %s30, 1
          %s323 = scalar_lea.sflag [#allocation7], %s322
          %s324 = sand.u32 %s78, 1
          %s325 = smul.addr %s324, 96
          %s326 = scalar_lea.vmem [#allocation6], %s325
          %s328 = ssub.s32 1536, 1536
          %329 = vsyncadd %s323, %s328
          %s330 = smul.addr %s38, 12
          %s331 = smul.addr %s330, 128
          %s332 = scalar_lea.hbm %s1, %s331
          %s333 = sshll.u32 %s326, 4
          %s334 = int_to_ptr.vmem [resolvable:$true] %s333
          %339 = dma.hbm_to_vmem [thread:$0]  %s332, 1536, %s334, %s323, 128, 128, 8
        $region28: #{tpu_custom_call.1} parent=19 // pred_fallthru
          _
        // Predicated region
        $region29: #{tpu_custom_call.1} parent=19 // pred_check
          %p340 = pneg %p114
        $region30: #{tpu_custom_call.1} parent=19 // pred_check_branch
          %342 = sbr.rel (%p340) target = $region32
        $region31: #{tpu_custom_call.1} parent=19 // pred_region
          %s343 = sand.u32 %s30, 1
          %s344 = scalar_lea.sflag [#allocation7], %s343
          %s345 = sand.u32 %s104, 1
          %s346 = smul.addr %s345, 96
          %s347 = scalar_lea.vmem [#allocation8], %s346
          %s349 = ssub.s32 1536, 1536
          %350 = vsyncadd %s344, %s349
          %s351 = smul.addr %s38, 12
          %s352 = smul.addr %s351, 128
          %s353 = scalar_lea.hbm %s2, %s352
          %s354 = sshll.u32 %s347, 4
          %s355 = int_to_ptr.vmem [resolvable:$true] %s354
          %360 = dma.hbm_to_vmem [thread:$0]  %s353, 1536, %s355, %s344, 128, 128, 8
        $region32: #{tpu_custom_call.1} parent=19 // pred_fallthru
          _
        // Predicated region
        $region33: #{tpu_custom_call.1} parent=19 // pred_check
          %p361 = pneg %p140
        $region34: #{tpu_custom_call.1} parent=19 // pred_check_branch
          %363 = sbr.rel (%p361) target = $region36
        $region35: #{tpu_custom_call.1} parent=19 // pred_region
          %s364 = sand.u32 %s30, 1
          %s365 = scalar_lea.sflag [#allocation10], %s364
          %s366 = sand.u32 %s130, 1
          %s367 = smul.addr %s366, 32
          %s368 = scalar_lea.vmem [#allocation9], %s367
          %s370 = ssub.s32 512, 512
          %371 = vsyncadd %s365, %s370
          %s372 = smul.addr %s38, 4
          %s373 = smul.addr %s372, 128
          %s374 = scalar_lea.hbm %s3, %s373
          %s375 = sshll.u32 %s368, 4
          %s376 = int_to_ptr.vmem [resolvable:$true] %s375
          %381 = dma.hbm_to_vmem [thread:$0]  %s374, 512, %s376, %s365, 128, 128, 8
        $region36: #{tpu_custom_call.1} parent=19 // pred_fallthru
          _
        // Predicated region
        $region37: #{tpu_custom_call.1} parent=19 // pred_check
          %p382 = pneg %p166
        $region38: #{tpu_custom_call.1} parent=19 // pred_check_branch
          %384 = sbr.rel (%p382) target = $region40
        $region39: #{tpu_custom_call.1} parent=19 // pred_region
          %s385 = sand.u32 %s30, 1
          %s386 = scalar_lea.sflag [#allocation10], %s385
          %s387 = sand.u32 %s156, 1
          %s388 = smul.addr %s387, 32
          %s389 = scalar_lea.vmem [#allocation11], %s388
          %s391 = ssub.s32 512, 512
          %392 = vsyncadd %s386, %s391
          %s393 = smul.addr %s38, 4
          %s394 = smul.addr %s393, 128
          %s395 = scalar_lea.hbm %s4, %s394
          %s396 = sshll.u32 %s389, 4
          %s397 = int_to_ptr.vmem [resolvable:$true] %s396
          %402 = dma.hbm_to_vmem [thread:$0]  %s395, 512, %s397, %s386, 128, 128, 8
        $region40: #{tpu_custom_call.1} parent=19 // pred_fallthru
          _
        // Predicated region
        $region41: #{tpu_custom_call.1} parent=19 // pred_check
          %p403 = pneg %p192
        $region42: #{tpu_custom_call.1} parent=19 // pred_check_branch
          %405 = sbr.rel (%p403) target = $region44
        $region43: #{tpu_custom_call.1} parent=19 // pred_region
          %s406 = sand.u32 %s30, 1
          %s407 = scalar_lea.sflag [#allocation13], %s406
          %s408 = sand.u32 %s182, 1
          %s409 = smul.addr %s408, 64
          %s410 = scalar_lea.vmem [#allocation12], %s409
          %s412 = ssub.s32 1024, 1024
          %413 = vsyncadd %s407, %s412
          %s414 = smul.addr %s38, 8
          %s415 = smul.addr %s414, 128
          %s416 = scalar_lea.hbm %s5, %s415
          %s417 = sshll.u32 %s410, 4
          %s418 = int_to_ptr.vmem [resolvable:$true] %s417
          %423 = dma.hbm_to_vmem [thread:$0]  %s416, 1024, %s418, %s407, 128, 128, 8
        $region44: #{tpu_custom_call.1} parent=19 // pred_fallthru
          _
        // Predicated region
        $region45: #{tpu_custom_call.1} parent=19 // pred_check
          %p424 = pneg %p218
        $region46: #{tpu_custom_call.1} parent=19 // pred_check_branch
          %426 = sbr.rel (%p424) target = $region48
        $region47: #{tpu_custom_call.1} parent=19 // pred_region
          %s427 = sand.u32 %s30, 1
          %s428 = scalar_lea.sflag [#allocation13], %s427
          %s429 = sand.u32 %s208, 1
          %s430 = smul.addr %s429, 8
          %s431 = scalar_lea.vmem [#allocation14], %s430
          %s433 = ssub.s32 128, 128
          %434 = vsyncadd %s428, %s433
          %s435 = smul.addr %s38, 128
          %s436 = scalar_lea.hbm %s6, %s435
          %s438 = sshll.u32 %s431, 4
          %s439 = int_to_ptr.vmem [resolvable:$true] %s438
          %441 = dma.hbm_to_vmem [thread:$0]  %s436, 128, %s439, %s428
        $region48: #{tpu_custom_call.1} parent=19 // pred_fallthru
          _
      $region20: #{tpu_custom_call.1} parent=5 // pred_fallthru
        _
      %p442 = scmp.le.s32.totalorder 1, %s30
      %p443 = scmp.lt.s32.totalorder %s30, 5
      %p444 = pnand %p442, %p443
      %p445 = pneg %p444
      // Predicated region
      $region49: #{tpu_custom_call.1} parent=5 // pred_check
        _
      $region50: #{tpu_custom_call.1} parent=5 // pred_check_branch
        %447 = sbr.rel (%p444) target = $region52
      $region51: #{tpu_custom_call.1} parent=5 // pred_region
        %s448 = ssub.s32 %s30, 1
        %s449 = sand.u32 %s55, 1
        %s450 = scalar_lea.sflag [#allocation4], %s449
        %s451 = sand.u32 %s55, 1
        %s452 = smul.addr %s451, 8
        %s453 = scalar_lea.vmem [#allocation3], %s452
        // Predicated region
        $region53: #{tpu_custom_call.1} parent=51 // pred_check
          %p454 = pneg %p68
        $region54: #{tpu_custom_call.1} parent=51 // pred_check_branch
          %456 = sbr.rel (%p454) target = $region56
        $region55: #{tpu_custom_call.1} parent=51 // pred_region
          %457 = dma.done %s450, 128
        $region56: #{tpu_custom_call.1} parent=51 // pred_fallthru
          _
        %s458 = sand.u32 %s35, 1
        %s459 = scalar_lea.sflag [#allocation7], %s458
        %s460 = sand.u32 %s81, 1
        %s461 = smul.addr %s460, 96
        %s462 = scalar_lea.vmem [#allocation6], %s461
        // Predicated region
        $region57: #{tpu_custom_call.1} parent=51 // pred_check
          %p463 = pneg %p94
        $region58: #{tpu_custom_call.1} parent=51 // pred_check_branch
          %465 = sbr.rel (%p463) target = $region60
        $region59: #{tpu_custom_call.1} parent=51 // pred_region
          %466 = dma.done %s459, 1536
        $region60: #{tpu_custom_call.1} parent=51 // pred_fallthru
          _
        %s467 = sand.u32 %s35, 1
        %s468 = scalar_lea.sflag [#allocation7], %s467
        %s469 = sand.u32 %s107, 1
        %s470 = smul.addr %s469, 96
        %s471 = scalar_lea.vmem [#allocation8], %s470
        // Predicated region
        $region61: #{tpu_custom_call.1} parent=51 // pred_check
          %p472 = pneg %p120
        $region62: #{tpu_custom_call.1} parent=51 // pred_check_branch
          %474 = sbr.rel (%p472) target = $region64
        $region63: #{tpu_custom_call.1} parent=51 // pred_region
          %475 = dma.done %s468, 1536
        $region64: #{tpu_custom_call.1} parent=51 // pred_fallthru
          _
        %s476 = sand.u32 %s35, 1
        %s477 = scalar_lea.sflag [#allocation10], %s476
        %s478 = sand.u32 %s133, 1
        %s479 = smul.addr %s478, 32
        %s480 = scalar_lea.vmem [#allocation9], %s479
        // Predicated region
        $region65: #{tpu_custom_call.1} parent=51 // pred_check
          %p481 = pneg %p146
        $region66: #{tpu_custom_call.1} parent=51 // pred_check_branch
          %483 = sbr.rel (%p481) target = $region68
        $region67: #{tpu_custom_call.1} parent=51 // pred_region
          %484 = dma.done %s477, 512
        $region68: #{tpu_custom_call.1} parent=51 // pred_fallthru
          _
        %s485 = sand.u32 %s35, 1
        %s486 = scalar_lea.sflag [#allocation10], %s485
        %s487 = sand.u32 %s159, 1
        %s488 = smul.addr %s487, 32
        %s489 = scalar_lea.vmem [#allocation11], %s488
        // Predicated region
        $region69: #{tpu_custom_call.1} parent=51 // pred_check
          %p490 = pneg %p172
        $region70: #{tpu_custom_call.1} parent=51 // pred_check_branch
          %492 = sbr.rel (%p490) target = $region72
        $region71: #{tpu_custom_call.1} parent=51 // pred_region
          %493 = dma.done %s486, 512
        $region72: #{tpu_custom_call.1} parent=51 // pred_fallthru
          _
        %s494 = sand.u32 %s35, 1
        %s495 = scalar_lea.sflag [#allocation13], %s494
        %s496 = sand.u32 %s185, 1
        %s497 = smul.addr %s496, 64
        %s498 = scalar_lea.vmem [#allocation12], %s497
        // Predicated region
        $region73: #{tpu_custom_call.1} parent=51 // pred_check
          %p499 = pneg %p198
        $region74: #{tpu_custom_call.1} parent=51 // pred_check_branch
          %501 = sbr.rel (%p499) target = $region76
        $region75: #{tpu_custom_call.1} parent=51 // pred_region
          %502 = dma.done %s495, 1024
        $region76: #{tpu_custom_call.1} parent=51 // pred_fallthru
          _
        %s503 = sand.u32 %s35, 1
        %s504 = scalar_lea.sflag [#allocation13], %s503
        %s505 = sand.u32 %s211, 1
        %s506 = smul.addr %s505, 8
        %s507 = scalar_lea.vmem [#allocation14], %s506
        // Predicated region
        $region77: #{tpu_custom_call.1} parent=51 // pred_check
          %p508 = pneg %p224
        $region78: #{tpu_custom_call.1} parent=51 // pred_check_branch
          %510 = sbr.rel (%p508) target = $region80
        $region79: #{tpu_custom_call.1} parent=51 // pred_region
          %511 = dma.done %s504, 128
        $region80: #{tpu_custom_call.1} parent=51 // pred_fallthru
          _
        // Predicated region
        $region81: #{tpu_custom_call.1} parent=51 // pred_check
          %p512 = pneg %p245
        $region82: #{tpu_custom_call.1} parent=51 // pred_check_branch
          %514 = sbr.rel (%p512) target = $region84
        $region83: #{tpu_custom_call.1} parent=51 // pred_region
          %515 = dma.done [#allocation16], 32
        $region84: #{tpu_custom_call.1} parent=51 // pred_fallthru
          _
        %s516 = sand.u32 %s55, 1
        %s517 = scalar_lea.sflag [#allocation4], %s516
        %s518 = sand.u32 %s55, 1
        %s519 = smul.addr %s518, 8
        %s520 = scalar_lea.vmem [#allocation3], %s519
        %p521 = pneg %p68
        %p522 = pneg %p65
        %s523 = sand.u32 %s35, 1
        %s524 = scalar_lea.sflag [#allocation7], %s523
        %s525 = sand.u32 %s81, 1
        %s526 = smul.addr %s525, 96
        %s527 = scalar_lea.vmem [#allocation6], %s526
        %p528 = pneg %p94
        %p529 = pneg %p91
        %s530 = sand.u32 %s35, 1
        %s531 = scalar_lea.sflag [#allocation7], %s530
        %s532 = sand.u32 %s107, 1
        %s533 = smul.addr %s532, 96
        %s534 = scalar_lea.vmem [#allocation8], %s533
        %p535 = pneg %p120
        %p536 = pneg %p117
        %s537 = sand.u32 %s35, 1
        %s538 = scalar_lea.sflag [#allocation10], %s537
        %s539 = sand.u32 %s133, 1
        %s540 = smul.addr %s539, 32
        %s541 = scalar_lea.vmem [#allocation9], %s540
        %p542 = pneg %p146
        %p543 = pneg %p143
        %s544 = sand.u32 %s35, 1
        %s545 = scalar_lea.sflag [#allocation10], %s544
        %s546 = sand.u32 %s159, 1
        %s547 = smul.addr %s546, 32
        %s548 = scalar_lea.vmem [#allocation11], %s547
        %p549 = pneg %p172
        %p550 = pneg %p169
        %s551 = sand.u32 %s35, 1
        %s552 = scalar_lea.sflag [#allocation13], %s551
        %s553 = sand.u32 %s185, 1
        %s554 = smul.addr %s553, 64
        %s555 = scalar_lea.vmem [#allocation12], %s554
        %p556 = pneg %p198
        %p557 = pneg %p195
        %s558 = sand.u32 %s35, 1
        %s559 = scalar_lea.sflag [#allocation13], %s558
        %s560 = sand.u32 %s211, 1
        %s561 = smul.addr %s560, 8
        %s562 = scalar_lea.vmem [#allocation14], %s561
        %p563 = pneg %p224
        %p564 = pneg %p221
        %p565 = pneg %p245
        %p566 = pneg %p242
        %p567 = pneg %p271
        %p568 = pneg %p268
        %s569 = sand.u32 %s258, 1
        %s570 = scalar_lea.sflag [#allocation5], %s569
        %s571 = sand.u32 %s258, 1
        %s572 = smul.addr %s571, 8
        %s573 = scalar_lea.vmem [#allocation17], %s572
        %p574 = scmp.eq.s32.totalorder %s40, 0
        // Predicated region
        $region85: #{tpu_custom_call.1} parent=51 // pred_check
          %p575 = pneg %p574
        $region86: #{tpu_custom_call.1} parent=51 // pred_check_branch
          %577 = sbr.rel (%p575) target = $region88
        $region87: #{tpu_custom_call.1} parent=51 // pred_region
          %v578 = vld [vmem:[%s453] sm:$0xff]
          %vm579 = vcmask 261120
          %580 = vst.msk [vmem:[#allocation2] sm:$0xff] %vm579, %v578
        $region88: #{tpu_custom_call.1} parent=51 // pred_fallthru
          _
        %v581 = vld [vmem:[#allocation2] sm:$0xff]
        %v582 = vld [vmem:[%s507] sm:$0xff]
        %v583 = vld [vmem:[%s462] sm:$0xff]
        %v584 = vld [vmem:[%s462 + $0x8] sm:$0xff]
        %v585 = vld [vmem:[%s462 + $0x10] sm:$0xff]
        %v586 = vld [vmem:[%s462 + $0x18] sm:$0xff]
        %v587 = vld [vmem:[%s462 + $0x20] sm:$0xff]
        %v588 = vld [vmem:[%s462 + $0x28] sm:$0xff]
        %v589 = vld [vmem:[%s462 + $0x30] sm:$0xff]
        %v590 = vld [vmem:[%s462 + $0x38] sm:$0xff]
        %v591 = vld [vmem:[%s462 + $0x40] sm:$0xff]
        %v592 = vld [vmem:[%s462 + $0x48] sm:$0xff]
        %v593 = vld [vmem:[%s462 + $0x50] sm:$0xff]
        %v594 = vld [vmem:[%s462 + $0x58] sm:$0xff]
        %v595 = vld [vmem:[%s471] sm:$0xff]
        %v596 = vld [vmem:[%s471 + $0x8] sm:$0xff]
        %v597 = vld [vmem:[%s471 + $0x10] sm:$0xff]
        %v598 = vld [vmem:[%s471 + $0x18] sm:$0xff]
        %v599 = vld [vmem:[%s471 + $0x20] sm:$0xff]
        %v600 = vld [vmem:[%s471 + $0x28] sm:$0xff]
        %v601 = vld [vmem:[%s471 + $0x30] sm:$0xff]
        %v602 = vld [vmem:[%s471 + $0x38] sm:$0xff]
        %v603 = vld [vmem:[%s471 + $0x40] sm:$0xff]
        %v604 = vld [vmem:[%s471 + $0x48] sm:$0xff]
        %v605 = vld [vmem:[%s471 + $0x50] sm:$0xff]
        %v606 = vld [vmem:[%s471 + $0x58] sm:$0xff]
        %608 = vset.pattern.permute.xlu0 0
        %609 = vperm.xlu0 %608, %v595
        %v610 = vpop.permute.xlu0 %609
        %613 = vset.pattern.permute.xlu0 0
        %614 = vperm.xlu0 %613, %v596
        %v615 = vpop.permute.xlu0 %614
        %618 = vset.pattern.permute.xlu0 0
        %619 = vperm.xlu0 %618, %v597
        %v620 = vpop.permute.xlu0 %619
        %623 = vset.pattern.permute.xlu0 0
        %624 = vperm.xlu0 %623, %v598
        %v625 = vpop.permute.xlu0 %624
        %628 = vset.pattern.permute.xlu0 0
        %629 = vperm.xlu0 %628, %v599
        %v630 = vpop.permute.xlu0 %629
        %633 = vset.pattern.permute.xlu0 0
        %634 = vperm.xlu0 %633, %v600
        %v635 = vpop.permute.xlu0 %634
        %638 = vset.pattern.permute.xlu0 0
        %639 = vperm.xlu0 %638, %v601
        %v640 = vpop.permute.xlu0 %639
        %643 = vset.pattern.permute.xlu0 0
        %644 = vperm.xlu0 %643, %v602
        %v645 = vpop.permute.xlu0 %644
        %648 = vset.pattern.permute.xlu0 0
        %649 = vperm.xlu0 %648, %v603
        %v650 = vpop.permute.xlu0 %649
        %653 = vset.pattern.permute.xlu0 0
        %654 = vperm.xlu0 %653, %v604
        %v655 = vpop.permute.xlu0 %654
        %658 = vset.pattern.permute.xlu0 0
        %659 = vperm.xlu0 %658, %v605
        %v660 = vpop.permute.xlu0 %659
        %663 = vset.pattern.permute.xlu0 0
        %664 = vperm.xlu0 %663, %v606
        %v665 = vpop.permute.xlu0 %664
        %vm667 = vcmask 261120
        %v669 = vsel %vm667, %v583, 0
        %v672 = vsel %vm667, %v584, 0
        %v675 = vsel %vm667, %v585, 0
        %v678 = vsel %vm667, %v586, 0
        %v681 = vsel %vm667, %v587, 0
        %v684 = vsel %vm667, %v588, 0
        %v687 = vsel %vm667, %v589, 0
        %v690 = vsel %vm667, %v590, 0
        %v693 = vsel %vm667, %v591, 0
        %v696 = vsel %vm667, %v592, 0
        %v699 = vsel %vm667, %v593, 0
        %v702 = vsel %vm667, %v594, 0
        %v705 = vsel %vm667, %v581, 0
        %707 = vmatprep.subr.mxu0 0.0
        %708 = vmatpush1.xpose.msra.mxu0 %v705
        %709 = vmatprep.subr.mxu0 0.0
        %710 = vmatpush1.xpose.msra.mxu0 0.0
        %711 = vmatprep.subr.mxu0 0.0
        %712 = vmatpush1.xpose.msra.mxu0 0.0
        %713 = vmatprep.subr.mxu0 0.0
        %714 = vmatpush1.xpose.msra.mxu0 0.0
        %715 = vmatprep.subr.mxu0 0.0
        %716 = vmatpush1.xpose.msra.mxu0 0.0
        %717 = vmatprep.subr.mxu0 0.0
        %718 = vmatpush1.xpose.msra.mxu0 0.0
        %719 = vmatprep.subr.mxu0 0.0
        %720 = vmatpush1.xpose.msra.mxu0 0.0
        %721 = vmatprep.subr.mxu0 0.0
        %722 = vmatpush1.xpose.msra.mxu0 0.0
        %723 = vmatprep.subr.mxu0 0.0
        %724 = vmatpush1.xpose.msra.mxu0 0.0
        %725 = vmatprep.subr.mxu0 0.0
        %726 = vmatpush1.xpose.msra.mxu0 0.0
        %727 = vmatprep.subr.mxu0 0.0
        %728 = vmatpush1.xpose.msra.mxu0 0.0
        %729 = vmatprep.subr.mxu0 0.0
        %730 = vmatpush1.xpose.msra.mxu0 0.0
        %731 = vmatprep.subr.mxu0 0.0
        %732 = vmatpush1.xpose.msra.mxu0 0.0
        %733 = vmatprep.subr.mxu0 0.0
        %734 = vmatpush1.xpose.msra.mxu0 0.0
        %735 = vmatprep.subr.mxu0 0.0
        %736 = vmatpush1.xpose.msra.mxu0 0.0
        %737 = vmatprep.subr.mxu0 0.0
        %738 = vmatpush1.xpose.msra.mxu0 0.0
        %739 = vmatprep.subr.mxu0 0.0
        %740 = vmatpush1.xpose.msra.mxu0 0.0
        %741 = vmatprep.subr.mxu0 0.0
        %742 = vmatpush1.xpose.msra.mxu0 0.0
        %743 = vmatprep.subr.mxu0 0.0
        %744 = vmatpush1.xpose.msra.mxu0 0.0
        %745 = vmatprep.subr.mxu0 0.0
        %746 = vmatpush1.xpose.msra.mxu0 0.0
        %747 = vmatprep.subr.mxu0 0.0
        %748 = vmatpush1.xpose.msra.mxu0 0.0
        %749 = vmatprep.subr.mxu0 0.0
        %750 = vmatpush1.xpose.msra.mxu0 0.0
        %751 = vmatprep.subr.mxu0 0.0
        %752 = vmatpush1.xpose.msra.mxu0 0.0
        %753 = vmatprep.subr.mxu0 0.0
        %754 = vmatpush1.xpose.msra.mxu0 0.0
        %755 = vmatprep.subr.mxu0 0.0
        %756 = vmatpush1.xpose.msra.mxu0 0.0
        %757 = vmatprep.subr.mxu0 0.0
        %758 = vmatpush1.xpose.msra.mxu0 0.0
        %759 = vmatprep.subr.mxu0 0.0
        %760 = vmatpush1.xpose.msra.mxu0 0.0
        %761 = vmatprep.subr.mxu0 0.0
        %762 = vmatpush1.xpose.msra.mxu0 0.0
        %763 = vmatprep.subr.mxu0 0.0
        %764 = vmatpush1.xpose.msra.mxu0 0.0
        %765 = vmatprep.subr.mxu0 0.0
        %766 = vmatpush1.xpose.msra.mxu0 0.0
        %767 = vmatprep.subr.mxu0 0.0
        %768 = vmatpush1.xpose.msra.mxu0 0.0
        %769 = vmatprep.subr.mxu0 0.0
        %770 = vmatpush1.xpose.msra.mxu0 0.0
        %771 = vmatprep.mubr.f32.mxu0 0.0
        %772 = vmatmul.mubr.f32.gmra.mrb[0].mxu0 %v669
        %v773 = vpop.f32.mrb[0].mxu0
        %v774 = vadd.f32 %v610, %v773
        %v775 = vpop.f32.mrb[0].mxu0
        %776 = vmatprep.mubr.f32.mxu0 0.0
        %777 = vmatmul.mubr.f32.gmra.mrb[0].mxu0 %v672
        %v778 = vpop.f32.mrb[0].mxu0
        %v779 = vadd.f32 %v615, %v778
        %v780 = vpop.f32.mrb[0].mxu0
        %781 = vmatprep.mubr.f32.mxu0 0.0
        %782 = vmatmul.mubr.f32.gmra.mrb[0].mxu0 %v675
        %v783 = vpop.f32.mrb[0].mxu0
        %v784 = vadd.f32 %v620, %v783
        %v785 = vpop.f32.mrb[0].mxu0
        %786 = vmatprep.mubr.f32.mxu0 0.0
        %787 = vmatmul.mubr.f32.gmra.mrb[0].mxu0 %v678
        %v788 = vpop.f32.mrb[0].mxu0
        %v789 = vadd.f32 %v625, %v788
        %v790 = vpop.f32.mrb[0].mxu0
        %791 = vmatprep.mubr.f32.mxu0 0.0
        %792 = vmatmul.mubr.f32.gmra.mrb[0].mxu0 %v681
        %v793 = vpop.f32.mrb[0].mxu0
        %v794 = vadd.f32 %v630, %v793
        %v795 = vpop.f32.mrb[0].mxu0
        %796 = vmatprep.mubr.f32.mxu0 0.0
        %797 = vmatmul.mubr.f32.gmra.mrb[0].mxu0 %v684
        %v798 = vpop.f32.mrb[0].mxu0
        %v799 = vadd.f32 %v635, %v798
        %v800 = vpop.f32.mrb[0].mxu0
        %801 = vmatprep.mubr.f32.mxu0 0.0
        %802 = vmatmul.mubr.f32.gmra.mrb[0].mxu0 %v687
        %v803 = vpop.f32.mrb[0].mxu0
        %v804 = vadd.f32 %v640, %v803
        %v805 = vpop.f32.mrb[0].mxu0
        %806 = vmatprep.mubr.f32.mxu0 0.0
        %807 = vmatmul.mubr.f32.gmra.mrb[0].mxu0 %v690
        %v808 = vpop.f32.mrb[0].mxu0
        %v809 = vadd.f32 %v645, %v808
        %v810 = vpop.f32.mrb[0].mxu0
        %811 = vmatprep.mubr.f32.mxu0 0.0
        %812 = vmatmul.mubr.f32.gmra.mrb[0].mxu0 %v693
        %v813 = vpop.f32.mrb[0].mxu0
        %v814 = vadd.f32 %v650, %v813
        %v815 = vpop.f32.mrb[0].mxu0
        %816 = vmatprep.mubr.f32.mxu0 0.0
        %817 = vmatmul.mubr.f32.gmra.mrb[0].mxu0 %v696
        %v818 = vpop.f32.mrb[0].mxu0
        %v819 = vadd.f32 %v655, %v818
        %v820 = vpop.f32.mrb[0].mxu0
        %821 = vmatprep.mubr.f32.mxu0 0.0
        %822 = vmatmul.mubr.f32.gmra.mrb[0].mxu0 %v699
        %v823 = vpop.f32.mrb[0].mxu0
        %v824 = vadd.f32 %v660, %v823
        %v825 = vpop.f32.mrb[0].mxu0
        %826 = vmatprep.mubr.f32.mxu0 0.0
        %827 = vmatmul.mubr.f32.gmra.mrb[0].mxu0 %v702
        %v828 = vpop.f32.mrb[0].mxu0
        %v829 = vadd.f32 %v665, %v828
        %v830 = vpop.f32.mrb[0].mxu0
        %831 = vdwg.mxu0
        %832 = vxpose.xlu0.b32.start [1/16] %v774, 128
        %833 = vxpose.xlu0.b32.cont [2/16] 0.0, 128
        %834 = vxpose.xlu0.b32.cont [3/16] 0.0, 128
        %835 = vxpose.xlu0.b32.cont [4/16] 0.0, 128
        %836 = vxpose.xlu0.b32.cont [5/16] 0.0, 128
        %837 = vxpose.xlu0.b32.cont [6/16] 0.0, 128
        %838 = vxpose.xlu0.b32.cont [7/16] 0.0, 128
        %839 = vxpose.xlu0.b32.cont [8/16] 0.0, 128
        %840 = vxpose.xlu0.b32.cont [9/16] 0.0, 128
        %841 = vxpose.xlu0.b32.cont [10/16] 0.0, 128
        %842 = vxpose.xlu0.b32.cont [11/16] 0.0, 128
        %843 = vxpose.xlu0.b32.cont [12/16] 0.0, 128
        %844 = vxpose.xlu0.b32.cont [13/16] 0.0, 128
        %845 = vxpose.xlu0.b32.cont [14/16] 0.0, 128
        %846 = vxpose.xlu0.b32.cont [15/16] 0.0, 128
        %847 = vxpose.xlu0.b32.end [16/16] 0.0, 128
        %v848 = vpop.trf.xlu0
        %v849 = vpop.trf.xlu0
        %v850 = vpop.trf.xlu0
        %v851 = vpop.trf.xlu0
        %v852 = vpop.trf.xlu0
        %v853 = vpop.trf.xlu0
        %v854 = vpop.trf.xlu0
        %v855 = vpop.trf.xlu0
        %v856 = vpop.trf.xlu0
        %v857 = vpop.trf.xlu0
        %v858 = vpop.trf.xlu0
        %v859 = vpop.trf.xlu0
        %v860 = vpop.trf.xlu0
        %v861 = vpop.trf.xlu0
        %v862 = vpop.trf.xlu0
        %v863 = vpop.trf.xlu0
        %vm864 = vcmask 64512
        %v866 = vsel %vm864, %v848, 0
        %868 = vmatprep.subr.mxu0 0.0
        %869 = vmatpush1.msra.mxu0 %v794
        %870 = vmatprep.subr.mxu0 0.0
        %871 = vmatpush1.msra.mxu0 0.0
        %872 = vmatprep.subr.mxu0 0.0
        %873 = vmatpush1.msra.mxu0 0.0
        %874 = vmatprep.subr.mxu0 0.0
        %875 = vmatpush1.msra.mxu0 0.0
        %876 = vmatprep.subr.mxu0 0.0
        %877 = vmatpush1.msra.mxu0 0.0
        %878 = vmatprep.subr.mxu0 0.0
        %879 = vmatpush1.msra.mxu0 0.0
        %880 = vmatprep.subr.mxu0 0.0
        %881 = vmatpush1.msra.mxu0 0.0
        %882 = vmatprep.subr.mxu0 0.0
        %883 = vmatpush1.msra.mxu0 0.0
        %884 = vmatprep.subr.mxu0 0.0
        %885 = vmatpush1.msra.mxu0 0.0
        %886 = vmatprep.subr.mxu0 0.0
        %887 = vmatpush1.msra.mxu0 0.0
        %888 = vmatprep.subr.mxu0 0.0
        %889 = vmatpush1.msra.mxu0 0.0
        %890 = vmatprep.subr.mxu0 0.0
        %891 = vmatpush1.msra.mxu0 0.0
        %892 = vmatprep.subr.mxu0 0.0
        %893 = vmatpush1.msra.mxu0 0.0
        %894 = vmatprep.subr.mxu0 0.0
        %895 = vmatpush1.msra.mxu0 0.0
        %896 = vmatprep.subr.mxu0 0.0
        %897 = vmatpush1.msra.mxu0 0.0
        %898 = vmatprep.subr.mxu0 0.0
        %899 = vmatpush1.msra.mxu0 0.0
        %900 = vmatprep.subr.mxu0 0.0
        %901 = vmatpush1.msra.mxu0 0.0
        %902 = vmatprep.subr.mxu0 0.0
        %903 = vmatpush1.msra.mxu0 0.0
        %904 = vmatprep.subr.mxu0 0.0
        %905 = vmatpush1.msra.mxu0 0.0
        %906 = vmatprep.subr.mxu0 0.0
        %907 = vmatpush1.msra.mxu0 0.0
        %908 = vmatprep.subr.mxu0 0.0
        %909 = vmatpush1.msra.mxu0 0.0
        %910 = vmatprep.subr.mxu0 0.0
        %911 = vmatpush1.msra.mxu0 0.0
        %912 = vmatprep.subr.mxu0 0.0
        %913 = vmatpush1.msra.mxu0 0.0
        %914 = vmatprep.subr.mxu0 0.0
        %915 = vmatpush1.msra.mxu0 0.0
        %916 = vmatprep.subr.mxu0 0.0
        %917 = vmatpush1.msra.mxu0 0.0
        %918 = vmatprep.subr.mxu0 0.0
        %919 = vmatpush1.msra.mxu0 0.0
        %920 = vmatprep.subr.mxu0 0.0
        %921 = vmatpush1.msra.mxu0 0.0
        %922 = vmatprep.subr.mxu0 0.0
        %923 = vmatpush1.msra.mxu0 0.0
        %924 = vmatprep.subr.mxu0 0.0
        %925 = vmatpush1.msra.mxu0 0.0
        %926 = vmatprep.subr.mxu0 0.0
        %927 = vmatpush1.msra.mxu0 0.0
        %928 = vmatprep.subr.mxu0 0.0
        %929 = vmatpush1.msra.mxu0 0.0
        %930 = vmatprep.subr.mxu0 0.0
        %931 = vmatpush1.msra.mxu0 0.0
        %932 = vmatprep.mubr.f32.mxu0 0.0
        %933 = vmatmul.mubr.f32.gmra.mrb[0].mxu0 %v866
        %v934 = vpop.f32.mrb[0].mxu0
        %v935 = vadd.f32 0.0, %v934
        %v936 = vpop.f32.mrb[0].mxu0
        %937 = vdwg.mxu0
        %938 = vxpose.xlu0.b32.start [1/16] %v779, 128
        %939 = vxpose.xlu0.b32.cont [2/16] 0.0, 128
        %940 = vxpose.xlu0.b32.cont [3/16] 0.0, 128
        %941 = vxpose.xlu0.b32.cont [4/16] 0.0, 128
        %942 = vxpose.xlu0.b32.cont [5/16] 0.0, 128
        %943 = vxpose.xlu0.b32.cont [6/16] 0.0, 128
        %944 = vxpose.xlu0.b32.cont [7/16] 0.0, 128
        %945 = vxpose.xlu0.b32.cont [8/16] 0.0, 128
        %946 = vxpose.xlu0.b32.cont [9/16] 0.0, 128
        %947 = vxpose.xlu0.b32.cont [10/16] 0.0, 128
        %948 = vxpose.xlu0.b32.cont [11/16] 0.0, 128
        %949 = vxpose.xlu0.b32.cont [12/16] 0.0, 128
        %950 = vxpose.xlu0.b32.cont [13/16] 0.0, 128
        %951 = vxpose.xlu0.b32.cont [14/16] 0.0, 128
        %952 = vxpose.xlu0.b32.cont [15/16] 0.0, 128
        %953 = vxpose.xlu0.b32.end [16/16] 0.0, 128
        %v954 = vpop.trf.xlu0
        %v955 = vpop.trf.xlu0
        %v956 = vpop.trf.xlu0
        %v957 = vpop.trf.xlu0
        %v958 = vpop.trf.xlu0
        %v959 = vpop.trf.xlu0
        %v960 = vpop.trf.xlu0
        %v961 = vpop.trf.xlu0
        %v962 = vpop.trf.xlu0
        %v963 = vpop.trf.xlu0
        %v964 = vpop.trf.xlu0
        %v965 = vpop.trf.xlu0
        %v966 = vpop.trf.xlu0
        %v967 = vpop.trf.xlu0
        %v968 = vpop.trf.xlu0
        %v969 = vpop.trf.xlu0
        %v971 = vsel %vm864, %v954, 0
        %973 = vmatprep.subr.mxu0 0.0
        %974 = vmatpush1.msra.mxu0 %v799
        %975 = vmatprep.subr.mxu0 0.0
        %976 = vmatpush1.msra.mxu0 0.0
        %977 = vmatprep.subr.mxu0 0.0
        %978 = vmatpush1.msra.mxu0 0.0
        %979 = vmatprep.subr.mxu0 0.0
        %980 = vmatpush1.msra.mxu0 0.0
        %981 = vmatprep.subr.mxu0 0.0
        %982 = vmatpush1.msra.mxu0 0.0
        %983 = vmatprep.subr.mxu0 0.0
        %984 = vmatpush1.msra.mxu0 0.0
        %985 = vmatprep.subr.mxu0 0.0
        %986 = vmatpush1.msra.mxu0 0.0
        %987 = vmatprep.subr.mxu0 0.0
        %988 = vmatpush1.msra.mxu0 0.0
        %989 = vmatprep.subr.mxu0 0.0
        %990 = vmatpush1.msra.mxu0 0.0
        %991 = vmatprep.subr.mxu0 0.0
        %992 = vmatpush1.msra.mxu0 0.0
        %993 = vmatprep.subr.mxu0 0.0
        %994 = vmatpush1.msra.mxu0 0.0
        %995 = vmatprep.subr.mxu0 0.0
        %996 = vmatpush1.msra.mxu0 0.0
        %997 = vmatprep.subr.mxu0 0.0
        %998 = vmatpush1.msra.mxu0 0.0
        %999 = vmatprep.subr.mxu0 0.0
        %1000 = vmatpush1.msra.mxu0 0.0
        %1001 = vmatprep.subr.mxu0 0.0
        %1002 = vmatpush1.msra.mxu0 0.0
        %1003 = vmatprep.subr.mxu0 0.0
        %1004 = vmatpush1.msra.mxu0 0.0
        %1005 = vmatprep.subr.mxu0 0.0
        %1006 = vmatpush1.msra.mxu0 0.0
        %1007 = vmatprep.subr.mxu0 0.0
        %1008 = vmatpush1.msra.mxu0 0.0
        %1009 = vmatprep.subr.mxu0 0.0
        %1010 = vmatpush1.msra.mxu0 0.0
        %1011 = vmatprep.subr.mxu0 0.0
        %1012 = vmatpush1.msra.mxu0 0.0
        %1013 = vmatprep.subr.mxu0 0.0
        %1014 = vmatpush1.msra.mxu0 0.0
        %1015 = vmatprep.subr.mxu0 0.0
        %1016 = vmatpush1.msra.mxu0 0.0
        %1017 = vmatprep.subr.mxu0 0.0
        %1018 = vmatpush1.msra.mxu0 0.0
        %1019 = vmatprep.subr.mxu0 0.0
        %1020 = vmatpush1.msra.mxu0 0.0
        %1021 = vmatprep.subr.mxu0 0.0
        %1022 = vmatpush1.msra.mxu0 0.0
        %1023 = vmatprep.subr.mxu0 0.0
        %1024 = vmatpush1.msra.mxu0 0.0
        %1025 = vmatprep.subr.mxu0 0.0
        %1026 = vmatpush1.msra.mxu0 0.0
        %1027 = vmatprep.subr.mxu0 0.0
        %1028 = vmatpush1.msra.mxu0 0.0
        %1029 = vmatprep.subr.mxu0 0.0
        %1030 = vmatpush1.msra.mxu0 0.0
        %1031 = vmatprep.subr.mxu0 0.0
        %1032 = vmatpush1.msra.mxu0 0.0
        %1033 = vmatprep.subr.mxu0 0.0
        %1034 = vmatpush1.msra.mxu0 0.0
        %1035 = vmatprep.subr.mxu0 0.0
        %1036 = vmatpush1.msra.mxu0 0.0
        %1037 = vmatprep.mubr.f32.mxu0 0.0
        %1038 = vmatmul.mubr.f32.gmra.mrb[0].mxu0 %v971
        %v1039 = vpop.f32.mrb[0].mxu0
        %v1040 = vadd.f32 0.0, %v1039
        %v1041 = vpop.f32.mrb[0].mxu0
        %1042 = vdwg.mxu0
        %1043 = vxpose.xlu0.b32.start [1/16] %v784, 128
        %1044 = vxpose.xlu0.b32.cont [2/16] 0.0, 128
        %1045 = vxpose.xlu0.b32.cont [3/16] 0.0, 128
        %1046 = vxpose.xlu0.b32.cont [4/16] 0.0, 128
        %1047 = vxpose.xlu0.b32.cont [5/16] 0.0, 128
        %1048 = vxpose.xlu0.b32.cont [6/16] 0.0, 128
        %1049 = vxpose.xlu0.b32.cont [7/16] 0.0, 128
        %1050 = vxpose.xlu0.b32.cont [8/16] 0.0, 128
        %1051 = vxpose.xlu0.b32.cont [9/16] 0.0, 128
        %1052 = vxpose.xlu0.b32.cont [10/16] 0.0, 128
        %1053 = vxpose.xlu0.b32.cont [11/16] 0.0, 128
        %1054 = vxpose.xlu0.b32.cont [12/16] 0.0, 128
        %1055 = vxpose.xlu0.b32.cont [13/16] 0.0, 128
        %1056 = vxpose.xlu0.b32.cont [14/16] 0.0, 128
        %1057 = vxpose.xlu0.b32.cont [15/16] 0.0, 128
        %1058 = vxpose.xlu0.b32.end [16/16] 0.0, 128
        %v1059 = vpop.trf.xlu0
        %v1060 = vpop.trf.xlu0
        %v1061 = vpop.trf.xlu0
        %v1062 = vpop.trf.xlu0
        %v1063 = vpop.trf.xlu0
        %v1064 = vpop.trf.xlu0
        %v1065 = vpop.trf.xlu0
        %v1066 = vpop.trf.xlu0
        %v1067 = vpop.trf.xlu0
        %v1068 = vpop.trf.xlu0
        %v1069 = vpop.trf.xlu0
        %v1070 = vpop.trf.xlu0
        %v1071 = vpop.trf.xlu0
        %v1072 = vpop.trf.xlu0
        %v1073 = vpop.trf.xlu0
        %v1074 = vpop.trf.xlu0
        %v1076 = vsel %vm864, %v1059, 0
        %1078 = vmatprep.subr.mxu0 0.0
        %1079 = vmatpush1.msra.mxu0 %v804
        %1080 = vmatprep.subr.mxu0 0.0
        %1081 = vmatpush1.msra.mxu0 0.0
        %1082 = vmatprep.subr.mxu0 0.0
        %1083 = vmatpush1.msra.mxu0 0.0
        %1084 = vmatprep.subr.mxu0 0.0
        %1085 = vmatpush1.msra.mxu0 0.0
        %1086 = vmatprep.subr.mxu0 0.0
        %1087 = vmatpush1.msra.mxu0 0.0
        %1088 = vmatprep.subr.mxu0 0.0
        %1089 = vmatpush1.msra.mxu0 0.0
        %1090 = vmatprep.subr.mxu0 0.0
        %1091 = vmatpush1.msra.mxu0 0.0
        %1092 = vmatprep.subr.mxu0 0.0
        %1093 = vmatpush1.msra.mxu0 0.0
        %1094 = vmatprep.subr.mxu0 0.0
        %1095 = vmatpush1.msra.mxu0 0.0
        %1096 = vmatprep.subr.mxu0 0.0
        %1097 = vmatpush1.msra.mxu0 0.0
        %1098 = vmatprep.subr.mxu0 0.0
        %1099 = vmatpush1.msra.mxu0 0.0
        %1100 = vmatprep.subr.mxu0 0.0
        %1101 = vmatpush1.msra.mxu0 0.0
        %1102 = vmatprep.subr.mxu0 0.0
        %1103 = vmatpush1.msra.mxu0 0.0
        %1104 = vmatprep.subr.mxu0 0.0
        %1105 = vmatpush1.msra.mxu0 0.0
        %1106 = vmatprep.subr.mxu0 0.0
        %1107 = vmatpush1.msra.mxu0 0.0
        %1108 = vmatprep.subr.mxu0 0.0
        %1109 = vmatpush1.msra.mxu0 0.0
        %1110 = vmatprep.subr.mxu0 0.0
        %1111 = vmatpush1.msra.mxu0 0.0
        %1112 = vmatprep.subr.mxu0 0.0
        %1113 = vmatpush1.msra.mxu0 0.0
        %1114 = vmatprep.subr.mxu0 0.0
        %1115 = vmatpush1.msra.mxu0 0.0
        %1116 = vmatprep.subr.mxu0 0.0
        %1117 = vmatpush1.msra.mxu0 0.0
        %1118 = vmatprep.subr.mxu0 0.0
        %1119 = vmatpush1.msra.mxu0 0.0
        %1120 = vmatprep.subr.mxu0 0.0
        %1121 = vmatpush1.msra.mxu0 0.0
        %1122 = vmatprep.subr.mxu0 0.0
        %1123 = vmatpush1.msra.mxu0 0.0
        %1124 = vmatprep.subr.mxu0 0.0
        %1125 = vmatpush1.msra.mxu0 0.0
        %1126 = vmatprep.subr.mxu0 0.0
        %1127 = vmatpush1.msra.mxu0 0.0
        %1128 = vmatprep.subr.mxu0 0.0
        %1129 = vmatpush1.msra.mxu0 0.0
        %1130 = vmatprep.subr.mxu0 0.0
        %1131 = vmatpush1.msra.mxu0 0.0
        %1132 = vmatprep.subr.mxu0 0.0
        %1133 = vmatpush1.msra.mxu0 0.0
        %1134 = vmatprep.subr.mxu0 0.0
        %1135 = vmatpush1.msra.mxu0 0.0
        %1136 = vmatprep.subr.mxu0 0.0
        %1137 = vmatpush1.msra.mxu0 0.0
        %1138 = vmatprep.subr.mxu0 0.0
        %1139 = vmatpush1.msra.mxu0 0.0
        %1140 = vmatprep.subr.mxu0 0.0
        %1141 = vmatpush1.msra.mxu0 0.0
        %1142 = vmatprep.mubr.f32.mxu0 0.0
        %1143 = vmatmul.mubr.f32.gmra.mrb[0].mxu0 %v1076
        %v1144 = vpop.f32.mrb[0].mxu0
        %v1145 = vadd.f32 0.0, %v1144
        %v1146 = vpop.f32.mrb[0].mxu0
        %1147 = vdwg.mxu0
        %1148 = vxpose.xlu0.b32.start [1/16] %v789, 128
        %1149 = vxpose.xlu0.b32.cont [2/16] 0.0, 128
        %1150 = vxpose.xlu0.b32.cont [3/16] 0.0, 128
        %1151 = vxpose.xlu0.b32.cont [4/16] 0.0, 128
        %1152 = vxpose.xlu0.b32.cont [5/16] 0.0, 128
        %1153 = vxpose.xlu0.b32.cont [6/16] 0.0, 128
        %1154 = vxpose.xlu0.b32.cont [7/16] 0.0, 128
        %1155 = vxpose.xlu0.b32.cont [8/16] 0.0, 128
        %1156 = vxpose.xlu0.b32.cont [9/16] 0.0, 128
        %1157 = vxpose.xlu0.b32.cont [10/16] 0.0, 128
        %1158 = vxpose.xlu0.b32.cont [11/16] 0.0, 128
        %1159 = vxpose.xlu0.b32.cont [12/16] 0.0, 128
        %1160 = vxpose.xlu0.b32.cont [13/16] 0.0, 128
        %1161 = vxpose.xlu0.b32.cont [14/16] 0.0, 128
        %1162 = vxpose.xlu0.b32.cont [15/16] 0.0, 128
        %1163 = vxpose.xlu0.b32.end [16/16] 0.0, 128
        %v1164 = vpop.trf.xlu0
        %v1165 = vpop.trf.xlu0
        %v1166 = vpop.trf.xlu0
        %v1167 = vpop.trf.xlu0
        %v1168 = vpop.trf.xlu0
        %v1169 = vpop.trf.xlu0
        %v1170 = vpop.trf.xlu0
        %v1171 = vpop.trf.xlu0
        %v1172 = vpop.trf.xlu0
        %v1173 = vpop.trf.xlu0
        %v1174 = vpop.trf.xlu0
        %v1175 = vpop.trf.xlu0
        %v1176 = vpop.trf.xlu0
        %v1177 = vpop.trf.xlu0
        %v1178 = vpop.trf.xlu0
        %v1179 = vpop.trf.xlu0
        %v1181 = vsel %vm864, %v1164, 0
        %1183 = vmatprep.subr.mxu0 0.0
        %1184 = vmatpush1.msra.mxu0 %v809
        %1185 = vmatprep.subr.mxu0 0.0
        %1186 = vmatpush1.msra.mxu0 0.0
        %1187 = vmatprep.subr.mxu0 0.0
        %1188 = vmatpush1.msra.mxu0 0.0
        %1189 = vmatprep.subr.mxu0 0.0
        %1190 = vmatpush1.msra.mxu0 0.0
        %1191 = vmatprep.subr.mxu0 0.0
        %1192 = vmatpush1.msra.mxu0 0.0
        %1193 = vmatprep.subr.mxu0 0.0
        %1194 = vmatpush1.msra.mxu0 0.0
        %1195 = vmatprep.subr.mxu0 0.0
        %1196 = vmatpush1.msra.mxu0 0.0
        %1197 = vmatprep.subr.mxu0 0.0
        %1198 = vmatpush1.msra.mxu0 0.0
        %1199 = vmatprep.subr.mxu0 0.0
        %1200 = vmatpush1.msra.mxu0 0.0
        %1201 = vmatprep.subr.mxu0 0.0
        %1202 = vmatpush1.msra.mxu0 0.0
        %1203 = vmatprep.subr.mxu0 0.0
        %1204 = vmatpush1.msra.mxu0 0.0
        %1205 = vmatprep.subr.mxu0 0.0
        %1206 = vmatpush1.msra.mxu0 0.0
        %1207 = vmatprep.subr.mxu0 0.0
        %1208 = vmatpush1.msra.mxu0 0.0
        %1209 = vmatprep.subr.mxu0 0.0
        %1210 = vmatpush1.msra.mxu0 0.0
        %1211 = vmatprep.subr.mxu0 0.0
        %1212 = vmatpush1.msra.mxu0 0.0
        %1213 = vmatprep.subr.mxu0 0.0
        %1214 = vmatpush1.msra.mxu0 0.0
        %1215 = vmatprep.subr.mxu0 0.0
        %1216 = vmatpush1.msra.mxu0 0.0
        %1217 = vmatprep.subr.mxu0 0.0
        %1218 = vmatpush1.msra.mxu0 0.0
        %1219 = vmatprep.subr.mxu0 0.0
        %1220 = vmatpush1.msra.mxu0 0.0
        %1221 = vmatprep.subr.mxu0 0.0
        %1222 = vmatpush1.msra.mxu0 0.0
        %1223 = vmatprep.subr.mxu0 0.0
        %1224 = vmatpush1.msra.mxu0 0.0
        %1225 = vmatprep.subr.mxu0 0.0
        %1226 = vmatpush1.msra.mxu0 0.0
        %1227 = vmatprep.subr.mxu0 0.0
        %1228 = vmatpush1.msra.mxu0 0.0
        %1229 = vmatprep.subr.mxu0 0.0
        %1230 = vmatpush1.msra.mxu0 0.0
        %1231 = vmatprep.subr.mxu0 0.0
        %1232 = vmatpush1.msra.mxu0 0.0
        %1233 = vmatprep.subr.mxu0 0.0
        %1234 = vmatpush1.msra.mxu0 0.0
        %1235 = vmatprep.subr.mxu0 0.0
        %1236 = vmatpush1.msra.mxu0 0.0
        %1237 = vmatprep.subr.mxu0 0.0
        %1238 = vmatpush1.msra.mxu0 0.0
        %1239 = vmatprep.subr.mxu0 0.0
        %1240 = vmatpush1.msra.mxu0 0.0
        %1241 = vmatprep.subr.mxu0 0.0
        %1242 = vmatpush1.msra.mxu0 0.0
        %1243 = vmatprep.subr.mxu0 0.0
        %1244 = vmatpush1.msra.mxu0 0.0
        %1245 = vmatprep.subr.mxu0 0.0
        %1246 = vmatpush1.msra.mxu0 0.0
        %1247 = vmatprep.mubr.f32.mxu0 0.0
        %1248 = vmatmul.mubr.f32.gmra.mrb[0].mxu0 %v1181
        %v1249 = vpop.f32.mrb[0].mxu0
        %v1250 = vadd.f32 0.0, %v1249
        %v1251 = vpop.f32.mrb[0].mxu0
        %1252 = vdwg.mxu0
        %v1253 = vsel %vm864, %v935, -inf
        %1254 = vmax.xlane.f32.xlu0 %v1253
        %v1255 = vpop.xlane.xlu0 %1254
        %v1256 = vsel %vm864, %v1040, -inf
        %1257 = vmax.xlane.f32.xlu0 %v1256
        %v1258 = vpop.xlane.xlu0 %1257
        %v1259 = vsel %vm864, %v1145, -inf
        %1260 = vmax.xlane.f32.xlu0 %v1259
        %v1261 = vpop.xlane.xlu0 %1260
        %v1262 = vsel %vm864, %v1250, -inf
        %1263 = vmax.xlane.f32.xlu0 %v1262
        %v1264 = vpop.xlane.xlu0 %1263
        %v1265 = vsub.f32 %v935, %v1255
        %v1266 = vsub.f32 %v1040, %v1258
        %v1267 = vsub.f32 %v1145, %v1261
        %v1268 = vsub.f32 %v1250, %v1264
        %v1269 = vmul.f32 %v1265, 1.442695
        %v1270 = vpow.pop %v1269
        %v1271 = vmul.f32 %v1266, 1.442695
        %v1272 = vpow.pop %v1271
        %v1273 = vmul.f32 %v1267, 1.442695
        %v1274 = vpow.pop %v1273
        %v1275 = vmul.f32 %v1268, 1.442695
        %v1276 = vpow.pop %v1275
        %v1277 = vsel %vm864, %v1270, 0.0
        %1278 = vadd.xlane.f32.xlu0 %v1277
        %v1279 = vpop.xlane.xlu0 %1278
        %v1280 = vsel %vm864, %v1272, 0.0
        %1281 = vadd.xlane.f32.xlu0 %v1280
        %v1282 = vpop.xlane.xlu0 %1281
        %v1283 = vsel %vm864, %v1274, 0.0
        %1284 = vadd.xlane.f32.xlu0 %v1283
        %v1285 = vpop.xlane.xlu0 %1284
        %v1286 = vsel %vm864, %v1276, 0.0
        %1287 = vadd.xlane.f32.xlu0 %v1286
        %v1288 = vpop.xlane.xlu0 %1287
        %v1289 = vrcp.pop %v1279
        %v1290 = vrcp.pop %v1282
        %v1291 = vrcp.pop %v1285
        %v1292 = vrcp.pop %v1288
        %v1293 = vmul.f32 %v1270, %v1289
        %v1294 = vmul.f32 %v1272, %v1290
        %v1295 = vmul.f32 %v1274, %v1291
        %v1296 = vmul.f32 %v1276, %v1292
        %v1298 = vsel %vm864, %v814, 0
        %v1301 = vsel %vm864, %v1293, 0
        %1303 = vmatprep.subr.mxu0 0.0
        %1304 = vmatpush1.xpose.msra.mxu0 %v1301
        %1305 = vmatprep.subr.mxu0 0.0
        %1306 = vmatpush1.xpose.msra.mxu0 0.0
        %1307 = vmatprep.subr.mxu0 0.0
        %1308 = vmatpush1.xpose.msra.mxu0 0.0
        %1309 = vmatprep.subr.mxu0 0.0
        %1310 = vmatpush1.xpose.msra.mxu0 0.0
        %1311 = vmatprep.subr.mxu0 0.0
        %1312 = vmatpush1.xpose.msra.mxu0 0.0
        %1313 = vmatprep.subr.mxu0 0.0
        %1314 = vmatpush1.xpose.msra.mxu0 0.0
        %1315 = vmatprep.subr.mxu0 0.0
        %1316 = vmatpush1.xpose.msra.mxu0 0.0
        %1317 = vmatprep.subr.mxu0 0.0
        %1318 = vmatpush1.xpose.msra.mxu0 0.0
        %1319 = vmatprep.subr.mxu0 0.0
        %1320 = vmatpush1.xpose.msra.mxu0 0.0
        %1321 = vmatprep.subr.mxu0 0.0
        %1322 = vmatpush1.xpose.msra.mxu0 0.0
        %1323 = vmatprep.subr.mxu0 0.0
        %1324 = vmatpush1.xpose.msra.mxu0 0.0
        %1325 = vmatprep.subr.mxu0 0.0
        %1326 = vmatpush1.xpose.msra.mxu0 0.0
        %1327 = vmatprep.subr.mxu0 0.0
        %1328 = vmatpush1.xpose.msra.mxu0 0.0
        %1329 = vmatprep.subr.mxu0 0.0
        %1330 = vmatpush1.xpose.msra.mxu0 0.0
        %1331 = vmatprep.subr.mxu0 0.0
        %1332 = vmatpush1.xpose.msra.mxu0 0.0
        %1333 = vmatprep.subr.mxu0 0.0
        %1334 = vmatpush1.xpose.msra.mxu0 0.0
        %1335 = vmatprep.subr.mxu0 0.0
        %1336 = vmatpush1.xpose.msra.mxu0 0.0
        %1337 = vmatprep.subr.mxu0 0.0
        %1338 = vmatpush1.xpose.msra.mxu0 0.0
        %1339 = vmatprep.subr.mxu0 0.0
        %1340 = vmatpush1.xpose.msra.mxu0 0.0
        %1341 = vmatprep.subr.mxu0 0.0
        %1342 = vmatpush1.xpose.msra.mxu0 0.0
        %1343 = vmatprep.subr.mxu0 0.0
        %1344 = vmatpush1.xpose.msra.mxu0 0.0
        %1345 = vmatprep.subr.mxu0 0.0
        %1346 = vmatpush1.xpose.msra.mxu0 0.0
        %1347 = vmatprep.subr.mxu0 0.0
        %1348 = vmatpush1.xpose.msra.mxu0 0.0
        %1349 = vmatprep.subr.mxu0 0.0
        %1350 = vmatpush1.xpose.msra.mxu0 0.0
        %1351 = vmatprep.subr.mxu0 0.0
        %1352 = vmatpush1.xpose.msra.mxu0 0.0
        %1353 = vmatprep.subr.mxu0 0.0
        %1354 = vmatpush1.xpose.msra.mxu0 0.0
        %1355 = vmatprep.subr.mxu0 0.0
        %1356 = vmatpush1.xpose.msra.mxu0 0.0
        %1357 = vmatprep.subr.mxu0 0.0
        %1358 = vmatpush1.xpose.msra.mxu0 0.0
        %1359 = vmatprep.subr.mxu0 0.0
        %1360 = vmatpush1.xpose.msra.mxu0 0.0
        %1361 = vmatprep.subr.mxu0 0.0
        %1362 = vmatpush1.xpose.msra.mxu0 0.0
        %1363 = vmatprep.subr.mxu0 0.0
        %1364 = vmatpush1.xpose.msra.mxu0 0.0
        %1365 = vmatprep.subr.mxu0 0.0
        %1366 = vmatpush1.xpose.msra.mxu0 0.0
        %1367 = vmatprep.mubr.f32.mxu0 0.0
        %1368 = vmatmul.mubr.f32.gmra.mrb[0].mxu0 %v1298
        %v1369 = vpop.f32.mrb[0].mxu0
        %v1370 = vadd.f32 0.0, %v1369
        %v1371 = vpop.f32.mrb[0].mxu0
        %1372 = vdwg.mxu0
        %v1374 = vsel %vm864, %v819, 0
        %v1377 = vsel %vm864, %v1294, 0
        %1379 = vmatprep.subr.mxu0 0.0
        %1380 = vmatpush1.xpose.msra.mxu0 %v1377
        %1381 = vmatprep.subr.mxu0 0.0
        %1382 = vmatpush1.xpose.msra.mxu0 0.0
        %1383 = vmatprep.subr.mxu0 0.0
        %1384 = vmatpush1.xpose.msra.mxu0 0.0
        %1385 = vmatprep.subr.mxu0 0.0
        %1386 = vmatpush1.xpose.msra.mxu0 0.0
        %1387 = vmatprep.subr.mxu0 0.0
        %1388 = vmatpush1.xpose.msra.mxu0 0.0
        %1389 = vmatprep.subr.mxu0 0.0
        %1390 = vmatpush1.xpose.msra.mxu0 0.0
        %1391 = vmatprep.subr.mxu0 0.0
        %1392 = vmatpush1.xpose.msra.mxu0 0.0
        %1393 = vmatprep.subr.mxu0 0.0
        %1394 = vmatpush1.xpose.msra.mxu0 0.0
        %1395 = vmatprep.subr.mxu0 0.0
        %1396 = vmatpush1.xpose.msra.mxu0 0.0
        %1397 = vmatprep.subr.mxu0 0.0
        %1398 = vmatpush1.xpose.msra.mxu0 0.0
        %1399 = vmatprep.subr.mxu0 0.0
        %1400 = vmatpush1.xpose.msra.mxu0 0.0
        %1401 = vmatprep.subr.mxu0 0.0
        %1402 = vmatpush1.xpose.msra.mxu0 0.0
        %1403 = vmatprep.subr.mxu0 0.0
        %1404 = vmatpush1.xpose.msra.mxu0 0.0
        %1405 = vmatprep.subr.mxu0 0.0
        %1406 = vmatpush1.xpose.msra.mxu0 0.0
        %1407 = vmatprep.subr.mxu0 0.0
        %1408 = vmatpush1.xpose.msra.mxu0 0.0
        %1409 = vmatprep.subr.mxu0 0.0
        %1410 = vmatpush1.xpose.msra.mxu0 0.0
        %1411 = vmatprep.subr.mxu0 0.0
        %1412 = vmatpush1.xpose.msra.mxu0 0.0
        %1413 = vmatprep.subr.mxu0 0.0
        %1414 = vmatpush1.xpose.msra.mxu0 0.0
        %1415 = vmatprep.subr.mxu0 0.0
        %1416 = vmatpush1.xpose.msra.mxu0 0.0
        %1417 = vmatprep.subr.mxu0 0.0
        %1418 = vmatpush1.xpose.msra.mxu0 0.0
        %1419 = vmatprep.subr.mxu0 0.0
        %1420 = vmatpush1.xpose.msra.mxu0 0.0
        %1421 = vmatprep.subr.mxu0 0.0
        %1422 = vmatpush1.xpose.msra.mxu0 0.0
        %1423 = vmatprep.subr.mxu0 0.0
        %1424 = vmatpush1.xpose.msra.mxu0 0.0
        %1425 = vmatprep.subr.mxu0 0.0
        %1426 = vmatpush1.xpose.msra.mxu0 0.0
        %1427 = vmatprep.subr.mxu0 0.0
        %1428 = vmatpush1.xpose.msra.mxu0 0.0
        %1429 = vmatprep.subr.mxu0 0.0
        %1430 = vmatpush1.xpose.msra.mxu0 0.0
        %1431 = vmatprep.subr.mxu0 0.0
        %1432 = vmatpush1.xpose.msra.mxu0 0.0
        %1433 = vmatprep.subr.mxu0 0.0
        %1434 = vmatpush1.xpose.msra.mxu0 0.0
        %1435 = vmatprep.subr.mxu0 0.0
        %1436 = vmatpush1.xpose.msra.mxu0 0.0
        %1437 = vmatprep.subr.mxu0 0.0
        %1438 = vmatpush1.xpose.msra.mxu0 0.0
        %1439 = vmatprep.subr.mxu0 0.0
        %1440 = vmatpush1.xpose.msra.mxu0 0.0
        %1441 = vmatprep.subr.mxu0 0.0
        %1442 = vmatpush1.xpose.msra.mxu0 0.0
        %1443 = vmatprep.mubr.f32.mxu0 0.0
        %1444 = vmatmul.mubr.f32.gmra.mrb[0].mxu0 %v1374
        %v1445 = vpop.f32.mrb[0].mxu0
        %v1446 = vadd.f32 0.0, %v1445
        %v1447 = vpop.f32.mrb[0].mxu0
        %1448 = vdwg.mxu0
        %v1450 = vsel %vm864, %v824, 0
        %v1453 = vsel %vm864, %v1295, 0
        %1455 = vmatprep.subr.mxu0 0.0
        %1456 = vmatpush1.xpose.msra.mxu0 %v1453
        %1457 = vmatprep.subr.mxu0 0.0
        %1458 = vmatpush1.xpose.msra.mxu0 0.0
        %1459 = vmatprep.subr.mxu0 0.0
        %1460 = vmatpush1.xpose.msra.mxu0 0.0
        %1461 = vmatprep.subr.mxu0 0.0
        %1462 = vmatpush1.xpose.msra.mxu0 0.0
        %1463 = vmatprep.subr.mxu0 0.0
        %1464 = vmatpush1.xpose.msra.mxu0 0.0
        %1465 = vmatprep.subr.mxu0 0.0
        %1466 = vmatpush1.xpose.msra.mxu0 0.0
        %1467 = vmatprep.subr.mxu0 0.0
        %1468 = vmatpush1.xpose.msra.mxu0 0.0
        %1469 = vmatprep.subr.mxu0 0.0
        %1470 = vmatpush1.xpose.msra.mxu0 0.0
        %1471 = vmatprep.subr.mxu0 0.0
        %1472 = vmatpush1.xpose.msra.mxu0 0.0
        %1473 = vmatprep.subr.mxu0 0.0
        %1474 = vmatpush1.xpose.msra.mxu0 0.0
        %1475 = vmatprep.subr.mxu0 0.0
        %1476 = vmatpush1.xpose.msra.mxu0 0.0
        %1477 = vmatprep.subr.mxu0 0.0
        %1478 = vmatpush1.xpose.msra.mxu0 0.0
        %1479 = vmatprep.subr.mxu0 0.0
        %1480 = vmatpush1.xpose.msra.mxu0 0.0
        %1481 = vmatprep.subr.mxu0 0.0
        %1482 = vmatpush1.xpose.msra.mxu0 0.0
        %1483 = vmatprep.subr.mxu0 0.0
        %1484 = vmatpush1.xpose.msra.mxu0 0.0
        %1485 = vmatprep.subr.mxu0 0.0
        %1486 = vmatpush1.xpose.msra.mxu0 0.0
        %1487 = vmatprep.subr.mxu0 0.0
        %1488 = vmatpush1.xpose.msra.mxu0 0.0
        %1489 = vmatprep.subr.mxu0 0.0
        %1490 = vmatpush1.xpose.msra.mxu0 0.0
        %1491 = vmatprep.subr.mxu0 0.0
        %1492 = vmatpush1.xpose.msra.mxu0 0.0
        %1493 = vmatprep.subr.mxu0 0.0
        %1494 = vmatpush1.xpose.msra.mxu0 0.0
        %1495 = vmatprep.subr.mxu0 0.0
        %1496 = vmatpush1.xpose.msra.mxu0 0.0
        %1497 = vmatprep.subr.mxu0 0.0
        %1498 = vmatpush1.xpose.msra.mxu0 0.0
        %1499 = vmatprep.subr.mxu0 0.0
        %1500 = vmatpush1.xpose.msra.mxu0 0.0
        %1501 = vmatprep.subr.mxu0 0.0
        %1502 = vmatpush1.xpose.msra.mxu0 0.0
        %1503 = vmatprep.subr.mxu0 0.0
        %1504 = vmatpush1.xpose.msra.mxu0 0.0
        %1505 = vmatprep.subr.mxu0 0.0
        %1506 = vmatpush1.xpose.msra.mxu0 0.0
        %1507 = vmatprep.subr.mxu0 0.0
        %1508 = vmatpush1.xpose.msra.mxu0 0.0
        %1509 = vmatprep.subr.mxu0 0.0
        %1510 = vmatpush1.xpose.msra.mxu0 0.0
        %1511 = vmatprep.subr.mxu0 0.0
        %1512 = vmatpush1.xpose.msra.mxu0 0.0
        %1513 = vmatprep.subr.mxu0 0.0
        %1514 = vmatpush1.xpose.msra.mxu0 0.0
        %1515 = vmatprep.subr.mxu0 0.0
        %1516 = vmatpush1.xpose.msra.mxu0 0.0
        %1517 = vmatprep.subr.mxu0 0.0
        %1518 = vmatpush1.xpose.msra.mxu0 0.0
        %1519 = vmatprep.mubr.f32.mxu0 0.0
        %1520 = vmatmul.mubr.f32.gmra.mrb[0].mxu0 %v1450
        %v1521 = vpop.f32.mrb[0].mxu0
        %v1522 = vadd.f32 0.0, %v1521
        %v1523 = vpop.f32.mrb[0].mxu0
        %1524 = vdwg.mxu0
        %v1526 = vsel %vm864, %v829, 0
        %v1529 = vsel %vm864, %v1296, 0
        %1531 = vmatprep.subr.mxu0 0.0
        %1532 = vmatpush1.xpose.msra.mxu0 %v1529
        %1533 = vmatprep.subr.mxu0 0.0
        %1534 = vmatpush1.xpose.msra.mxu0 0.0
        %1535 = vmatprep.subr.mxu0 0.0
        %1536 = vmatpush1.xpose.msra.mxu0 0.0
        %1537 = vmatprep.subr.mxu0 0.0
        %1538 = vmatpush1.xpose.msra.mxu0 0.0
        %1539 = vmatprep.subr.mxu0 0.0
        %1540 = vmatpush1.xpose.msra.mxu0 0.0
        %1541 = vmatprep.subr.mxu0 0.0
        %1542 = vmatpush1.xpose.msra.mxu0 0.0
        %1543 = vmatprep.subr.mxu0 0.0
        %1544 = vmatpush1.xpose.msra.mxu0 0.0
        %1545 = vmatprep.subr.mxu0 0.0
        %1546 = vmatpush1.xpose.msra.mxu0 0.0
        %1547 = vmatprep.subr.mxu0 0.0
        %1548 = vmatpush1.xpose.msra.mxu0 0.0
        %1549 = vmatprep.subr.mxu0 0.0
        %1550 = vmatpush1.xpose.msra.mxu0 0.0
        %1551 = vmatprep.subr.mxu0 0.0
        %1552 = vmatpush1.xpose.msra.mxu0 0.0
        %1553 = vmatprep.subr.mxu0 0.0
        %1554 = vmatpush1.xpose.msra.mxu0 0.0
        %1555 = vmatprep.subr.mxu0 0.0
        %1556 = vmatpush1.xpose.msra.mxu0 0.0
        %1557 = vmatprep.subr.mxu0 0.0
        %1558 = vmatpush1.xpose.msra.mxu0 0.0
        %1559 = vmatprep.subr.mxu0 0.0
        %1560 = vmatpush1.xpose.msra.mxu0 0.0
        %1561 = vmatprep.subr.mxu0 0.0
        %1562 = vmatpush1.xpose.msra.mxu0 0.0
        %1563 = vmatprep.subr.mxu0 0.0
        %1564 = vmatpush1.xpose.msra.mxu0 0.0
        %1565 = vmatprep.subr.mxu0 0.0
        %1566 = vmatpush1.xpose.msra.mxu0 0.0
        %1567 = vmatprep.subr.mxu0 0.0
        %1568 = vmatpush1.xpose.msra.mxu0 0.0
        %1569 = vmatprep.subr.mxu0 0.0
        %1570 = vmatpush1.xpose.msra.mxu0 0.0
        %1571 = vmatprep.subr.mxu0 0.0
        %1572 = vmatpush1.xpose.msra.mxu0 0.0
        %1573 = vmatprep.subr.mxu0 0.0
        %1574 = vmatpush1.xpose.msra.mxu0 0.0
        %1575 = vmatprep.subr.mxu0 0.0
        %1576 = vmatpush1.xpose.msra.mxu0 0.0
        %1577 = vmatprep.subr.mxu0 0.0
        %1578 = vmatpush1.xpose.msra.mxu0 0.0
        %1579 = vmatprep.subr.mxu0 0.0
        %1580 = vmatpush1.xpose.msra.mxu0 0.0
        %1581 = vmatprep.subr.mxu0 0.0
        %1582 = vmatpush1.xpose.msra.mxu0 0.0
        %1583 = vmatprep.subr.mxu0 0.0
        %1584 = vmatpush1.xpose.msra.mxu0 0.0
        %1585 = vmatprep.subr.mxu0 0.0
        %1586 = vmatpush1.xpose.msra.mxu0 0.0
        %1587 = vmatprep.subr.mxu0 0.0
        %1588 = vmatpush1.xpose.msra.mxu0 0.0
        %1589 = vmatprep.subr.mxu0 0.0
        %1590 = vmatpush1.xpose.msra.mxu0 0.0
        %1591 = vmatprep.subr.mxu0 0.0
        %1592 = vmatpush1.xpose.msra.mxu0 0.0
        %1593 = vmatprep.subr.mxu0 0.0
        %1594 = vmatpush1.xpose.msra.mxu0 0.0
        %1595 = vmatprep.mubr.f32.mxu0 0.0
        %1596 = vmatmul.mubr.f32.gmra.mrb[0].mxu0 %v1526
        %v1597 = vpop.f32.mrb[0].mxu0
        %v1598 = vadd.f32 0.0, %v1597
        %v1599 = vpop.f32.mrb[0].mxu0
        %1600 = vdwg.mxu0
        %v1601 = vld [vmem:[%s480] sm:$0xff]
        %v1602 = vld [vmem:[%s480 + $0x8] sm:$0xff]
        %v1603 = vld [vmem:[%s480 + $0x10] sm:$0xff]
        %v1604 = vld [vmem:[%s480 + $0x18] sm:$0xff]
        %v1605 = vlaneseq
        %v1606 = vshrl.u32 %v1605, 7
        %v1607 = vsub.s32 0, %v1606
        %v1608 = vrot.slane %v582, %v1607
        %1609 = vxpose.xlu0.b32.start [1/16] %v1370, 128
        %1610 = vxpose.xlu0.b32.cont [2/16] %v1446, 128
        %1611 = vxpose.xlu0.b32.cont [3/16] %v1522, 128
        %1612 = vxpose.xlu0.b32.cont [4/16] %v1598, 128
        %1613 = vxpose.xlu0.b32.cont [5/16] 0.0, 128
        %1614 = vxpose.xlu0.b32.cont [6/16] 0.0, 128
        %1615 = vxpose.xlu0.b32.cont [7/16] 0.0, 128
        %1616 = vxpose.xlu0.b32.cont [8/16] 0.0, 128
        %1617 = vxpose.xlu0.b32.cont [9/16] 0.0, 128
        %1618 = vxpose.xlu0.b32.cont [10/16] 0.0, 128
        %1619 = vxpose.xlu0.b32.cont [11/16] 0.0, 128
        %1620 = vxpose.xlu0.b32.cont [12/16] 0.0, 128
        %1621 = vxpose.xlu0.b32.cont [13/16] 0.0, 128
        %1622 = vxpose.xlu0.b32.cont [14/16] 0.0, 128
        %1623 = vxpose.xlu0.b32.cont [15/16] 0.0, 128
        %1624 = vxpose.xlu0.b32.end [16/16] 0.0, 128
        %v1625 = vpop.trf.xlu0
        %v1626 = vpop.trf.xlu0
        %v1627 = vpop.trf.xlu0
        %v1628 = vpop.trf.xlu0
        %v1629 = vpop.trf.xlu0
        %v1630 = vpop.trf.xlu0
        %v1631 = vpop.trf.xlu0
        %v1632 = vpop.trf.xlu0
        %v1633 = vpop.trf.xlu0
        %v1634 = vpop.trf.xlu0
        %v1635 = vpop.trf.xlu0
        %v1636 = vpop.trf.xlu0
        %v1637 = vpop.trf.xlu0
        %v1638 = vpop.trf.xlu0
        %v1639 = vpop.trf.xlu0
        %v1640 = vpop.trf.xlu0
        %v1642 = vsel %vm667, %v1625, 0
        %v1645 = vsel %vm667, %v1601, 0
        %v1648 = vsel %vm667, %v1602, 0
        %v1651 = vsel %vm667, %v1603, 0
        %v1654 = vsel %vm667, %v1604, 0
        %1656 = vmatprep.subr.mxu0 0.0
        %1657 = vmatpush1.xpose.msra.mxu0 %v1645
        %1658 = vmatprep.subr.mxu0 0.0
        %1659 = vmatpush1.xpose.msra.mxu0 %v1648
        %1660 = vmatprep.subr.mxu0 0.0
        %1661 = vmatpush1.xpose.msra.mxu0 %v1651
        %1662 = vmatprep.subr.mxu0 0.0
        %1663 = vmatpush1.xpose.msra.mxu0 %v1654
        %1664 = vmatprep.subr.mxu0 0.0
        %1665 = vmatpush1.xpose.msra.mxu0 0.0
        %1666 = vmatprep.subr.mxu0 0.0
        %1667 = vmatpush1.xpose.msra.mxu0 0.0
        %1668 = vmatprep.subr.mxu0 0.0
        %1669 = vmatpush1.xpose.msra.mxu0 0.0
        %1670 = vmatprep.subr.mxu0 0.0
        %1671 = vmatpush1.xpose.msra.mxu0 0.0
        %1672 = vmatprep.subr.mxu0 0.0
        %1673 = vmatpush1.xpose.msra.mxu0 0.0
        %1674 = vmatprep.subr.mxu0 0.0
        %1675 = vmatpush1.xpose.msra.mxu0 0.0
        %1676 = vmatprep.subr.mxu0 0.0
        %1677 = vmatpush1.xpose.msra.mxu0 0.0
        %1678 = vmatprep.subr.mxu0 0.0
        %1679 = vmatpush1.xpose.msra.mxu0 0.0
        %1680 = vmatprep.subr.mxu0 0.0
        %1681 = vmatpush1.xpose.msra.mxu0 0.0
        %1682 = vmatprep.subr.mxu0 0.0
        %1683 = vmatpush1.xpose.msra.mxu0 0.0
        %1684 = vmatprep.subr.mxu0 0.0
        %1685 = vmatpush1.xpose.msra.mxu0 0.0
        %1686 = vmatprep.subr.mxu0 0.0
        %1687 = vmatpush1.xpose.msra.mxu0 0.0
        %1688 = vmatprep.subr.mxu0 0.0
        %1689 = vmatpush1.xpose.msra.mxu0 0.0
        %1690 = vmatprep.subr.mxu0 0.0
        %1691 = vmatpush1.xpose.msra.mxu0 0.0
        %1692 = vmatprep.subr.mxu0 0.0
        %1693 = vmatpush1.xpose.msra.mxu0 0.0
        %1694 = vmatprep.subr.mxu0 0.0
        %1695 = vmatpush1.xpose.msra.mxu0 0.0
        %1696 = vmatprep.subr.mxu0 0.0
        %1697 = vmatpush1.xpose.msra.mxu0 0.0
        %1698 = vmatprep.subr.mxu0 0.0
        %1699 = vmatpush1.xpose.msra.mxu0 0.0
        %1700 = vmatprep.subr.mxu0 0.0
        %1701 = vmatpush1.xpose.msra.mxu0 0.0
        %1702 = vmatprep.subr.mxu0 0.0
        %1703 = vmatpush1.xpose.msra.mxu0 0.0
        %1704 = vmatprep.subr.mxu0 0.0
        %1705 = vmatpush1.xpose.msra.mxu0 0.0
        %1706 = vmatprep.subr.mxu0 0.0
        %1707 = vmatpush1.xpose.msra.mxu0 0.0
        %1708 = vmatprep.subr.mxu0 0.0
        %1709 = vmatpush1.xpose.msra.mxu0 0.0
        %1710 = vmatprep.subr.mxu0 0.0
        %1711 = vmatpush1.xpose.msra.mxu0 0.0
        %1712 = vmatprep.subr.mxu0 0.0
        %1713 = vmatpush1.xpose.msra.mxu0 0.0
        %1714 = vmatprep.subr.mxu0 0.0
        %1715 = vmatpush1.xpose.msra.mxu0 0.0
        %1716 = vmatprep.subr.mxu0 0.0
        %1717 = vmatpush1.xpose.msra.mxu0 0.0
        %1718 = vmatprep.subr.mxu0 0.0
        %1719 = vmatpush1.xpose.msra.mxu0 0.0
        %1720 = vmatprep.mubr.f32.mxu0 0.0
        %1721 = vmatmul.mubr.f32.gmra.mrb[0].mxu0 %v1642
        %v1722 = vpop.f32.mrb[0].mxu0
        %v1723 = vadd.f32 %v1608, %v1722
        %v1724 = vpop.f32.mrb[0].mxu0
        %1725 = vdwg.mxu0
        %v1726 = vadd.f32 %v581, %v1723
        %v1727 = vsel %vm667, %v1726, 0.0
        %1728 = vadd.xlane.f32.xlu0 %v1727
        %v1729 = vpop.xlane.xlu0 %1728
        %v1730 = vrcp.pop 32.0
        %v1731 = vmul.f32 %v1729, %v1730
        %v1732 = vsub.f32 %v1726, %v1731
        %v1733 = vmul.f32 %v1732, %v1732
        %v1734 = vsel %vm667, %v1733, 0.0
        %1735 = vadd.xlane.f32.xlu0 %v1734
        %v1736 = vpop.xlane.xlu0 %1735
        %v1737 = vmul.f32 %v1736, %v1730
        %v1738 = vadd.f32 %v1737, 1e-05
        %v1739 = vrsqrt.pop %v1738
        %v1740 = vmul.f32 %v1732, %v1739
        %v1741 = vlaneseq
        %v1742 = vshrl.u32 %v1741, 7
        %v1743 = vsub.s32 3, %v1742
        %v1744 = vrot.slane %v582, %v1743
        %v1745 = vmul.f32 %v1740, %v1744
        %v1746 = vlaneseq
        %v1747 = vshrl.u32 %v1746, 7
        %v1748 = vsub.s32 4, %v1747
        %v1749 = vrot.slane %v582, %v1748
        %v1750 = vadd.f32 %v1745, %v1749
        %v1751 = vld [vmem:[%s489] sm:$0xff]
        %v1752 = vld [vmem:[%s489 + $0x8] sm:$0xff]
        %v1753 = vld [vmem:[%s489 + $0x10] sm:$0xff]
        %v1754 = vld [vmem:[%s489 + $0x18] sm:$0xff]
        %v1755 = vlaneseq
        %v1756 = vshrl.u32 %v1755, 7
        %v1757 = vsub.s32 1, %v1756
        %v1758 = vrot.slane %v582, %v1757
        %v1760 = vsel %vm667, %v1750, 0
        %1762 = vmatprep.subr.mxu0 0.0
        %1763 = vmatpush1.msra.mxu0 %v1751
        %1764 = vmatprep.subr.mxu0 0.0
        %1765 = vmatpush1.msra.mxu0 %v1752
        %1766 = vmatprep.subr.mxu0 0.0
        %1767 = vmatpush1.msra.mxu0 %v1753
        %1768 = vmatprep.subr.mxu0 0.0
        %1769 = vmatpush1.msra.mxu0 %v1754
        %1770 = vmatprep.subr.mxu0 0.0
        %1771 = vmatpush1.msra.mxu0 0.0
        %1772 = vmatprep.subr.mxu0 0.0
        %1773 = vmatpush1.msra.mxu0 0.0
        %1774 = vmatprep.subr.mxu0 0.0
        %1775 = vmatpush1.msra.mxu0 0.0
        %1776 = vmatprep.subr.mxu0 0.0
        %1777 = vmatpush1.msra.mxu0 0.0
        %1778 = vmatprep.subr.mxu0 0.0
        %1779 = vmatpush1.msra.mxu0 0.0
        %1780 = vmatprep.subr.mxu0 0.0
        %1781 = vmatpush1.msra.mxu0 0.0
        %1782 = vmatprep.subr.mxu0 0.0
        %1783 = vmatpush1.msra.mxu0 0.0
        %1784 = vmatprep.subr.mxu0 0.0
        %1785 = vmatpush1.msra.mxu0 0.0
        %1786 = vmatprep.subr.mxu0 0.0
        %1787 = vmatpush1.msra.mxu0 0.0
        %1788 = vmatprep.subr.mxu0 0.0
        %1789 = vmatpush1.msra.mxu0 0.0
        %1790 = vmatprep.subr.mxu0 0.0
        %1791 = vmatpush1.msra.mxu0 0.0
        %1792 = vmatprep.subr.mxu0 0.0
        %1793 = vmatpush1.msra.mxu0 0.0
        %1794 = vmatprep.subr.mxu0 0.0
        %1795 = vmatpush1.msra.mxu0 0.0
        %1796 = vmatprep.subr.mxu0 0.0
        %1797 = vmatpush1.msra.mxu0 0.0
        %1798 = vmatprep.subr.mxu0 0.0
        %1799 = vmatpush1.msra.mxu0 0.0
        %1800 = vmatprep.subr.mxu0 0.0
        %1801 = vmatpush1.msra.mxu0 0.0
        %1802 = vmatprep.subr.mxu0 0.0
        %1803 = vmatpush1.msra.mxu0 0.0
        %1804 = vmatprep.subr.mxu0 0.0
        %1805 = vmatpush1.msra.mxu0 0.0
        %1806 = vmatprep.subr.mxu0 0.0
        %1807 = vmatpush1.msra.mxu0 0.0
        %1808 = vmatprep.subr.mxu0 0.0
        %1809 = vmatpush1.msra.mxu0 0.0
        %1810 = vmatprep.subr.mxu0 0.0
        %1811 = vmatpush1.msra.mxu0 0.0
        %1812 = vmatprep.subr.mxu0 0.0
        %1813 = vmatpush1.msra.mxu0 0.0
        %1814 = vmatprep.subr.mxu0 0.0
        %1815 = vmatpush1.msra.mxu0 0.0
        %1816 = vmatprep.subr.mxu0 0.0
        %1817 = vmatpush1.msra.mxu0 0.0
        %1818 = vmatprep.subr.mxu0 0.0
        %1819 = vmatpush1.msra.mxu0 0.0
        %1820 = vmatprep.subr.mxu0 0.0
        %1821 = vmatpush1.msra.mxu0 0.0
        %1822 = vmatprep.subr.mxu0 0.0
        %1823 = vmatpush1.msra.mxu0 0.0
        %1824 = vmatprep.subr.mxu0 0.0
        %1825 = vmatpush1.msra.mxu0 0.0
        %1826 = vmatprep.mubr.f32.mxu0 0.0
        %1827 = vmatmul.mubr.f32.gmra.mrb[0].mxu0 %v1760
        %v1828 = vpop.f32.mrb[0].mxu0
        %v1829 = vadd.f32 %v1758, %v1828
        %v1830 = vpop.f32.mrb[0].mxu0
        %1831 = vdwg.mxu0
        %v1832 = vmax.f32 %v1829, 0.0
        %v1833 = vld [vmem:[%s498] sm:$0xff]
        %v1834 = vld [vmem:[%s498 + $0x8] sm:$0xff]
        %v1835 = vld [vmem:[%s498 + $0x10] sm:$0xff]
        %v1836 = vld [vmem:[%s498 + $0x18] sm:$0xff]
        %v1837 = vld [vmem:[%s498 + $0x20] sm:$0xff]
        %v1838 = vld [vmem:[%s498 + $0x28] sm:$0xff]
        %v1839 = vld [vmem:[%s498 + $0x30] sm:$0xff]
        %v1840 = vld [vmem:[%s498 + $0x38] sm:$0xff]
        %v1841 = vlaneseq
        %v1842 = vshrl.u32 %v1841, 7
        %v1843 = vsub.s32 2, %v1842
        %v1844 = vrot.slane %v582, %v1843
        %vm1845 = vcmask 523264
        %v1847 = vsel %vm1845, %v1832, 0
        %1849 = vmatprep.subr.mxu0 0.0
        %1850 = vmatpush1.msra.mxu0 %v1833
        %1851 = vmatprep.subr.mxu0 0.0
        %1852 = vmatpush1.msra.mxu0 %v1834
        %1853 = vmatprep.subr.mxu0 0.0
        %1854 = vmatpush1.msra.mxu0 %v1835
        %1855 = vmatprep.subr.mxu0 0.0
        %1856 = vmatpush1.msra.mxu0 %v1836
        %1857 = vmatprep.subr.mxu0 0.0
        %1858 = vmatpush1.msra.mxu0 %v1837
        %1859 = vmatprep.subr.mxu0 0.0
        %1860 = vmatpush1.msra.mxu0 %v1838
        %1861 = vmatprep.subr.mxu0 0.0
        %1862 = vmatpush1.msra.mxu0 %v1839
        %1863 = vmatprep.subr.mxu0 0.0
        %1864 = vmatpush1.msra.mxu0 %v1840
        %1865 = vmatprep.subr.mxu0 0.0
        %1866 = vmatpush1.msra.mxu0 0.0
        %1867 = vmatprep.subr.mxu0 0.0
        %1868 = vmatpush1.msra.mxu0 0.0
        %1869 = vmatprep.subr.mxu0 0.0
        %1870 = vmatpush1.msra.mxu0 0.0
        %1871 = vmatprep.subr.mxu0 0.0
        %1872 = vmatpush1.msra.mxu0 0.0
        %1873 = vmatprep.subr.mxu0 0.0
        %1874 = vmatpush1.msra.mxu0 0.0
        %1875 = vmatprep.subr.mxu0 0.0
        %1876 = vmatpush1.msra.mxu0 0.0
        %1877 = vmatprep.subr.mxu0 0.0
        %1878 = vmatpush1.msra.mxu0 0.0
        %1879 = vmatprep.subr.mxu0 0.0
        %1880 = vmatpush1.msra.mxu0 0.0
        %1881 = vmatprep.subr.mxu0 0.0
        %1882 = vmatpush1.msra.mxu0 0.0
        %1883 = vmatprep.subr.mxu0 0.0
        %1884 = vmatpush1.msra.mxu0 0.0
        %1885 = vmatprep.subr.mxu0 0.0
        %1886 = vmatpush1.msra.mxu0 0.0
        %1887 = vmatprep.subr.mxu0 0.0
        %1888 = vmatpush1.msra.mxu0 0.0
        %1889 = vmatprep.subr.mxu0 0.0
        %1890 = vmatpush1.msra.mxu0 0.0
        %1891 = vmatprep.subr.mxu0 0.0
        %1892 = vmatpush1.msra.mxu0 0.0
        %1893 = vmatprep.subr.mxu0 0.0
        %1894 = vmatpush1.msra.mxu0 0.0
        %1895 = vmatprep.subr.mxu0 0.0
        %1896 = vmatpush1.msra.mxu0 0.0
        %1897 = vmatprep.subr.mxu0 0.0
        %1898 = vmatpush1.msra.mxu0 0.0
        %1899 = vmatprep.subr.mxu0 0.0
        %1900 = vmatpush1.msra.mxu0 0.0
        %1901 = vmatprep.subr.mxu0 0.0
        %1902 = vmatpush1.msra.mxu0 0.0
        %1903 = vmatprep.subr.mxu0 0.0
        %1904 = vmatpush1.msra.mxu0 0.0
        %1905 = vmatprep.subr.mxu0 0.0
        %1906 = vmatpush1.msra.mxu0 0.0
        %1907 = vmatprep.subr.mxu0 0.0
        %1908 = vmatpush1.msra.mxu0 0.0
        %1909 = vmatprep.subr.mxu0 0.0
        %1910 = vmatpush1.msra.mxu0 0.0
        %1911 = vmatprep.subr.mxu0 0.0
        %1912 = vmatpush1.msra.mxu0 0.0
        %1913 = vmatprep.mubr.f32.mxu0 0.0
        %1914 = vmatmul.mubr.f32.gmra.mrb[0].mxu0 %v1847
        %v1915 = vpop.f32.mrb[0].mxu0
        %v1916 = vadd.f32 %v1844, %v1915
        %v1917 = vpop.f32.mrb[0].mxu0
        %1918 = vdwg.mxu0
        %v1919 = vadd.f32 %v1750, %v1916
        %v1920 = vsel %vm667, %v1919, 0.0
        %1921 = vadd.xlane.f32.xlu0 %v1920
        %v1922 = vpop.xlane.xlu0 %1921
        %v1923 = vmul.f32 %v1922, %v1730
        %v1924 = vsub.f32 %v1919, %v1923
        %v1925 = vmul.f32 %v1924, %v1924
        %v1926 = vsel %vm667, %v1925, 0.0
        %1927 = vadd.xlane.f32.xlu0 %v1926
        %v1928 = vpop.xlane.xlu0 %1927
        %v1929 = vmul.f32 %v1928, %v1730
        %v1930 = vadd.f32 %v1929, 1e-05
        %v1931 = vrsqrt.pop %v1930
        %v1932 = vmul.f32 %v1924, %v1931
        %v1933 = vlaneseq
        %v1934 = vshrl.u32 %v1933, 7
        %v1935 = vsub.s32 5, %v1934
        %v1936 = vrot.slane %v582, %v1935
        %v1937 = vmul.f32 %v1932, %v1936
        %v1938 = vlaneseq
        %v1939 = vshrl.u32 %v1938, 7
        %v1940 = vsub.s32 6, %v1939
        %v1941 = vrot.slane %v582, %v1940
        %v1942 = vadd.f32 %v1937, %v1941
        %1943 = vst.msk [vmem:[#allocation2] sm:$0xff] %vm667, %v1942
        %p1944 = scmp.eq.s32.totalorder %s40, 1
        // Predicated region
        $region89: #{tpu_custom_call.1} parent=51 // pred_check
          %p1945 = pneg %p1944
        $region90: #{tpu_custom_call.1} parent=51 // pred_check_branch
          %1947 = sbr.rel (%p1945) target = $region92
        $region91: #{tpu_custom_call.1} parent=51 // pred_region
          %v1948 = vld [vmem:[#allocation15] sm:$0x3]
          %v1949 = vsel %vm667, %v1942, 0.0
          %1950 = vadd.xlane.f32.xlu0 %v1949
          %v1951 = vpop.xlane.xlu0 %1950
          %v1952 = vmul.f32 %v1951, %v1730
          %v1953 = vsub.f32 %v1942, %v1952
          %v1954 = vmul.f32 %v1953, %v1953
          %v1955 = vsel %vm667, %v1954, 0.0
          %1956 = vadd.xlane.f32.xlu0 %v1955
          %v1957 = vpop.xlane.xlu0 %1956
          %v1958 = vmul.f32 %v1957, %v1730
          %v1959 = vadd.f32 %v1958, 1e-05
          %v1960 = vrsqrt.pop %v1959
          %v1961 = vmul.f32 %v1953, %v1960
          %v1962 = vlaneseq
          %v1963 = vshrl.u32 %v1962, 7
          %v1964 = vsub.s32 0, %v1963
          %v1965 = vrot.slane %v1948, %v1964
          %v1966 = vmul.f32 %v1961, %v1965
          %v1967 = vlaneseq
          %v1968 = vshrl.u32 %v1967, 7
          %v1969 = vsub.s32 1, %v1968
          %v1970 = vrot.slane %v1948, %v1969
          %v1971 = vadd.f32 %v1966, %v1970
          %1972 = vst.msk [vmem:[%s573] sm:$0xff] %vm667, %v1971
        $region92: #{tpu_custom_call.1} parent=51 // pred_fallthru
          _
        %s1973 = sand.u32 %s258, 1
        %s1974 = scalar_lea.sflag [#allocation5], %s1973
        %s1975 = sand.u32 %s258, 1
        %s1976 = smul.addr %s1975, 8
        %s1977 = scalar_lea.vmem [#allocation17], %s1976
        // Predicated region
        $region93: #{tpu_custom_call.1} parent=51 // pred_check
          %p1978 = pneg %p268
        $region94: #{tpu_custom_call.1} parent=51 // pred_check_branch
          %1980 = sbr.rel (%p1978) target = $region96
        $region95: #{tpu_custom_call.1} parent=51 // pred_region
          %s1982 = ssub.s32 128, 128
          %1983 = vsyncadd %s1974, %s1982
          %s1984 = smul.addr %s39, 128
          %s1985 = scalar_lea.hbm %s8, %s1984
          %s1987 = sshll.u32 %s1977, 4
          %s1988 = int_to_ptr.vmem [resolvable:$true] %s1987
          %1990 = dma.vmem_to_hbm [thread:$0]  %s1988, 128, %s1985, %s1974
        $region96: #{tpu_custom_call.1} parent=51 // pred_fallthru
          _
      $region52: #{tpu_custom_call.1} parent=5 // pred_fallthru
        _
      %p1991 = scmp.le.s32.totalorder 2, %s30
      // Predicated region
      $region97: #{tpu_custom_call.1} parent=5 // pred_check
        %p1992 = pneg %p1991
      $region98: #{tpu_custom_call.1} parent=5 // pred_check_branch
        %1994 = sbr.rel (%p1992) target = $region100
      $region99: #{tpu_custom_call.1} parent=5 // pred_region
        %s1995 = ssub.s32 %s30, 2
        // Predicated region
        $region101: #{tpu_custom_call.1} parent=99 // pred_check
          %p1996 = pneg %p274
        $region102: #{tpu_custom_call.1} parent=99 // pred_check_branch
          %1998 = sbr.rel (%p1996) target = $region104
        $region103: #{tpu_custom_call.1} parent=99 // pred_region
          %s1999 = sand.u32 %s259, 1
          %s2000 = scalar_lea.sflag [#allocation5], %s1999
          %s2001 = sand.u32 %s259, 1
          %s2002 = smul.addr %s2001, 8
          %s2003 = scalar_lea.vmem [#allocation17], %s2002
          %2004 = dma.done %s2000, 128
        $region104: #{tpu_custom_call.1} parent=99 // pred_fallthru
          _
      $region100: #{tpu_custom_call.1} parent=5 // pred_fallthru
        _
    $region6: #{tpu_custom_call.1} parent=1 // loop_footer
      %s34 = sadd.s32 1, %s30
    $region7: #{tpu_custom_call.1} parent=1 // loop_footer_branch
      %29 = sbr.rel target = $region3
    $region8: #{tpu_custom_call.1} parent=1 // loop_exit
      _
    %2005 = vsyncpa [#allocation4], 1
    %s2006 = scalar_lea.sflag [#allocation4], 1
    %2007 = vsyncpa %s2006, 1
    %2008 = vsyncpa [#allocation7], 1
    %s2009 = scalar_lea.sflag [#allocation7], 1
    %2010 = vsyncpa %s2009, 1
    %2011 = vsyncpa [#allocation10], 1
    %s2012 = scalar_lea.sflag [#allocation10], 1
    %2013 = vsyncpa %s2012, 1
    %2014 = vsyncpa [#allocation13], 1
    %s2015 = scalar_lea.sflag [#allocation13], 1
    %2016 = vsyncpa %s2015, 1
    %2017 = vsyncpa [#allocation16], 1
    %2018 = vsyncpa [#allocation5], 1
    %s2019 = scalar_lea.sflag [#allocation5], 1
    %2020 = vsyncpa %s2019, 1

</llo_original>
